<compile_context>
chip_gen: v6e
topology: v6e:2x2x1
jax: 0.10.0
libtpu: 0.0.40
codegen_flags: <defaults>
</compile_context>

<pallas_src>
import functools

import jax
import jax.numpy as jnp
from jax.experimental import pallas as pl
from jax.experimental.pallas import tpu as pltpu


def _softplus(z):
    return jnp.maximum(z, 0.0) + jnp.log1p(jnp.exp(-jnp.abs(z)))


def _layer1(w_ref, a_ref, k_dim, use_vpu):
    """(H, K) x (K, T) -> (H, T) contraction.

    For tiny K (NRE's theta / summary-x features) a handful of broadcast
    multiply-adds on the VPU beats a degenerate small-K MXU matmul (full
    systolic push/pop for a sliver of the array).  MXU fallback for larger K.
    """
    if use_vpu:
        out = w_ref[:, 0:1] * a_ref[0:1, :]
        for k in range(1, k_dim):
            out = out + w_ref[:, k:k + 1] * a_ref[k:k + 1, :]
        return out
    return jnp.dot(w_ref[...], a_ref[...], preferred_element_type=jnp.float32)


def _nre_loss_kernel(thetaT_ref, xT_ref, w1tT_ref, w1xT_ref, w2T_ref,
                     consts_ref, wrap_ref, out_ref,
                     acc_ref, carry_ref, slab_ref,
                     *, tile_n, n_td, n_xd, inv_2n, vpu_theta, vpu_x):
    c = pl.program_id(0)          # core chunk ("parallel")
    i = pl.program_id(1)          # row tile within the chunk ("arbitrary")
    f32 = jnp.float32

    @pl.when(i == 0)
    def _init():
        acc_ref[...] = jnp.zeros_like(acc_ref)
        # Seed the roll carry with the layer-1 theta term of the wrap row
        # (theta[N-1] for chunk 0, last row of the previous chunk otherwise).
        seed = w1tT_ref[:, 0:1] * wrap_ref[c, 0]
        for k in range(1, n_td):
            seed = seed + w1tT_ref[:, k:k + 1] * wrap_ref[c, k]
        carry_ref[...] = seed

    # ---- layer 1: theta / x contributions, each computed once per tile ----
    t1 = _layer1(w1tT_ref, thetaT_ref, n_td, vpu_theta)                # (H, T)
    sx = _layer1(w1xT_ref, xT_ref, n_xd, vpu_x) + consts_ref[:, 0:1]   # (H, T) + b1

    # ---- both branches written straight into the (H, 2T) VMEM slab ----
    cdt = slab_ref.dtype
    slab_ref[:, 0:tile_n] = jnp.maximum(t1 + sx, 0.0).astype(cdt)
    t1_rolled = pltpu.roll(t1, shift=1, axis=1)          # batch axis = lanes
    slab_ref[:, tile_n:2 * tile_n] = jnp.maximum(t1_rolled + sx, 0.0).astype(cdt)
    # Fix the wrap column of the rolled branch from the carried previous row.
    slab_ref[:, tile_n:tile_n + 1] = jnp.maximum(
        carry_ref[...] + sx[:, 0:1], 0.0).astype(cdt)
    carry_ref[...] = t1[:, tile_n - 1:tile_n]            # carry for next tile

    # ---- layer 2 on the MXU straight from the slab ----
    h2 = jnp.maximum(
        jnp.dot(w2T_ref[...], slab_ref[...], preferred_element_type=f32)
        + consts_ref[:, 1:2], 0.0)                                     # (H, 2T)

    # ---- output head + softplus epilogue, lane-dense (1, 2T) ----
    logits = (jnp.sum(h2 * consts_ref[:, 2:3], axis=0, keepdims=True)
              + consts_ref[0:1, 3:4])                                  # (1, 2T)
    # first T lanes: d(theta_i, x_i)   -> -logsigmoid(z)  = softplus(-z)
    # last  T lanes: d(theta_{i-1},x_i)-> -logsigmoid(-z) = softplus(+z)
    nls = _softplus(-logits[:, 0:tile_n]) + _softplus(logits[:, tile_n:2 * tile_n])
    acc_ref[...] += jnp.sum(nls, axis=1, keepdims=True)

    @pl.when(i == pl.num_programs(1) - 1)
    def _finalize():
        out_ref[...] = jnp.broadcast_to(acc_ref[...] * inv_2n, out_ref.shape)


def nre_loss_pallas(theta, x, params, *, tile_n=None, num_cores=1,
                    compute_dtype=jnp.bfloat16):
    """NRE cross-entropy loss with a feature-major Pallas TPU kernel.

    theta: (N, D) f32, x: (N, L) f32 (N must be a multiple of 128).
    params: w1 (D+L, H), b1 (1, H), w2 (H, H), b2 (1, H), w3 (H, 1), b3 (1, 1).
    num_cores: set 2 on v7x to shard row tiles across both TensorCores.
    compute_dtype: dtype of the (H,H) matmul operands; bf16 is right on
      v5e/v6e/v7x (the MXU is natively bf16); biases/softplus/accumulation
      stay in f32 either way.
    """
    n, d = theta.shape
    l = x.shape[1]
    h = params["w1"].shape[1]
    f32 = jnp.float32

    # TODO(synk): support N that is not a multiple of 128 via a masked final tile.
    assert n % 128 == 0, "N must be a multiple of 128 (pad the batch)"

    if tile_n is None:
        for t in (1024, 512, 256, 128):   # largest first: ~0.35us fixed cost/grid step
            if n % t == 0:
                tile_n = t
                break
    assert tile_n % 128 == 0 and n % tile_n == 0, \
        "row tile must be a multiple of 128 that divides N"
    num_tiles = n // tile_n
    if num_tiles % num_cores != 0:
        num_cores = 1
    tiles_per_core = num_tiles // num_cores
    rows_per_core = tiles_per_core * tile_n

    # Zero-pad the hidden dim to a lane multiple (exact: padded units are dead).
    h_pad = ((h + 127) // 128) * 128
    ph = h_pad - h

    w1T = params["w1"].T.astype(f32)                                   # (H, D+L)
    w1tT = jnp.pad(w1T[:, :d], ((0, ph), (0, 0)))                      # (Hp, D)
    w1xT = jnp.pad(w1T[:, d:], ((0, ph), (0, 0)))                      # (Hp, L)
    w2T = jnp.pad(params["w2"].T, ((0, ph), (0, ph))).astype(compute_dtype)
    consts = jnp.concatenate([                                          # (Hp, 4) f32
        jnp.pad(params["b1"].T, ((0, ph), (0, 0))),
        jnp.pad(params["b2"].T, ((0, ph), (0, 0))),
        jnp.pad(params["w3"], ((0, ph), (0, 0))),
        jnp.full((h_pad, 1), params["b3"][0, 0], f32),
    ], axis=1).astype(f32)

    thetaT = theta.T.astype(f32)                                       # (D, N)
    xT = x.T.astype(f32)                                               # (L, N)
    # Per-chunk wrap rows for the batch roll: theta[first_row_of_chunk - 1].
    wrap = theta[jnp.array([(c * rows_per_core - 1) % n
                            for c in range(num_cores)])].astype(f32)   # (C, D)

    kernel = functools.partial(
        _nre_loss_kernel, tile_n=tile_n, n_td=d, n_xd=l,
        inv_2n=1.0 / (2.0 * n), vpu_theta=(d <= 16), vpu_x=(l <= 16))

    tpc = tiles_per_core
    tile_map = lambda c, i: (0, c * tpc + i)
    const = lambda c, i: (0, 0)

    out = pl.pallas_call(
        kernel,
        grid=(num_cores, tiles_per_core),
        in_specs=[
            pl.BlockSpec((d, tile_n), tile_map),                   # theta^T tile
            pl.BlockSpec((l, tile_n), tile_map),                   # x^T tile
            pl.BlockSpec((h_pad, d), const),                       # w1_theta^T
            pl.BlockSpec((h_pad, l), const),                       # w1_x^T
            pl.BlockSpec((h_pad, h_pad), const),                   # w2^T
            pl.BlockSpec((h_pad, 4), const),                       # [b1|b2|w3|b3]
            pl.BlockSpec(memory_space=pltpu.MemorySpace.SMEM),     # wrap rows
        ],
        out_specs=pl.BlockSpec((8, 128), lambda c, i: (c, 0)),
        out_shape=jax.ShapeDtypeStruct((num_cores * 8, 128), f32),
        scratch_shapes=[
            pltpu.VMEM((1, 1), f32),                         # loss accumulator
            pltpu.VMEM((h_pad, 1), f32),                     # carried layer-1 theta row
            pltpu.VMEM((h_pad, 2 * tile_n), compute_dtype),  # [h1 | h1_rolled] slab
        ],
        compiler_params=pltpu.CompilerParams(
            dimension_semantics=("parallel", "arbitrary"),
            vmem_limit_bytes=48 * 1024 * 1024),
    )(thetaT, xT, w1tT, w1xT, w2T, consts, wrap)

    # Each chunk wrote its partial (already scaled by 1/(2N)) broadcast over an
    # (8, 128) lane-dense output block; take one element per chunk and sum.
    return jnp.sum(out[::8, 0])


def nre_loss_reference(theta, x, params):
    """Pure-JAX reference matching the PyTorch NRELoss semantics."""
    def d(feats):
        h1 = jnp.maximum(feats @ params["w1"] + params["b1"], 0.0)
        h2 = jnp.maximum(h1 @ params["w2"] + params["b2"], 0.0)
        return (h2 @ params["w3"] + params["b3"])[..., 0]

    theta_prime = jnp.roll(theta, 1, axis=0)
    log_r = d(jnp.concatenate([theta, x], axis=-1))
    log_r_prime = d(jnp.concatenate([theta_prime, x], axis=-1))
    l1 = jnp.mean(-jax.nn.log_sigmoid(log_r))
    l0 = jnp.mean(-jax.nn.log_sigmoid(-log_r_prime))
    return (l1 + l0) / 2


def make_params(key, d, l, h):
    """Deterministic synthetic MLP parameters (F = D + L -> H -> H -> 1)."""
    f = d + l
    k1, k2, k3 = jax.random.split(key, 3)
    return {
        "w1": jax.random.normal(k1, (f, h), jnp.float32) / jnp.sqrt(f),
        "b1": jnp.zeros((1, h), jnp.float32),
        "w2": jax.random.normal(k2, (h, h), jnp.float32) / jnp.sqrt(h),
        "b2": jnp.zeros((1, h), jnp.float32),
        "w3": jax.random.normal(k3, (h, 1), jnp.float32) / jnp.sqrt(h),
        "b3": jnp.zeros((1, 1), jnp.float32),
    }


if __name__ == "__main__":
    N, D, L, H = 256, 3, 5, 64   # small NRE-like sizes; H=64 exercises lane padding

    key = jax.random.PRNGKey(0)
    k_theta, k_x, k_params = jax.random.split(key, 3)
    theta = jax.random.normal(k_theta, (N, D), jnp.float32)
    x = jax.random.normal(k_x, (N, L), jnp.float32)
    params = make_params(k_params, D, L, H)

    ref = nre_loss_reference(theta, x, params)

    # f32 matmuls, single chunk, two row tiles -> exercises the carry chain.
    loss = jax.block_until_ready(
        nre_loss_pallas(theta, x, params, tile_n=128, num_cores=1,
                        compute_dtype=jnp.float32))
    assert jnp.isfinite(loss), "loss is not finite"
    assert jnp.allclose(loss, ref, rtol=1e-4, atol=1e-4), (loss, ref)

    # f32 matmuls, two core chunks (v7x megacore layout; also correct on 1-TC chips).
    loss2 = jax.block_until_ready(
        nre_loss_pallas(theta, x, params, tile_n=128, num_cores=2,
                        compute_dtype=jnp.float32))
    assert jnp.allclose(loss2, ref, rtol=1e-4, atol=1e-4), (loss2, ref)

    # Default bf16 matmul operands (f32 epilogue), auto tile -> single 256-row tile.
    loss_bf16 = jax.block_until_ready(nre_loss_pallas(theta, x, params))
    assert jnp.isfinite(loss_bf16), "bf16 loss is not finite"
    assert jnp.allclose(loss_bf16, ref, rtol=5e-2, atol=5e-2), (loss_bf16, ref)

    print("KERNEL_OK")
</pallas_src>

<mosaic_0001>
module attributes {stable_mosaic.version = 11 : i64} {
  func.func @_nre_loss_kernel(%arg0: i32, %arg1: i32, %arg2: memref<3x128xf32, #tpu.memory_space<vmem>>, %arg3: memref<5x128xf32, #tpu.memory_space<vmem>>, %arg4: memref<128x3xf32, #tpu.memory_space<vmem>>, %arg5: memref<128x5xf32, #tpu.memory_space<vmem>>, %arg6: memref<128x128xf32, #tpu.memory_space<vmem>>, %arg7: memref<128x4xf32, #tpu.memory_space<vmem>>, %arg8: memref<1x3xf32, #tpu.memory_space<smem>>, %arg9: memref<8x128xf32, #tpu.memory_space<vmem>>, %arg10: memref<1x1xf32, #tpu.memory_space<vmem>>, %arg11: memref<128x1xf32, #tpu.memory_space<vmem>>, %arg12: memref<128x256xf32, #tpu.memory_space<vmem>>) attributes {dimension_semantics = [#tpu.dimension_semantics<parallel>, #tpu.dimension_semantics<arbitrary>], iteration_bounds = array<i64: 1, 2>, scalar_prefetch = 0 : i64, scratch_operands = 3 : i64, tpu.core_type = #tpu.core_type<tc>, window_params = [{transform_indices = @transform_0, window_bounds = array<i64: 3, 128>}, {transform_indices = @transform_1, window_bounds = array<i64: 5, 128>}, {pipeline_mode = #tpu.pipeline_mode<synchronous>, transform_indices = @transform_2, window_bounds = array<i64: 128, 3>}, {pipeline_mode = #tpu.pipeline_mode<synchronous>, transform_indices = @transform_3, window_bounds = array<i64: 128, 5>}, {pipeline_mode = #tpu.pipeline_mode<synchronous>, transform_indices = @transform_4, window_bounds = array<i64: 128, 128>}, {pipeline_mode = #tpu.pipeline_mode<synchronous>, transform_indices = @transform_5, window_bounds = array<i64: 128, 4>}, {transform_indices = @transform_6, window_bounds = array<i64: 1, 3>}, {transform_indices = @transform_7, window_bounds = array<i64: 8, 128>}]} {
    %c0_i32 = arith.constant 0 : i32
    %0 = arith.cmpi eq, %arg1, %c0_i32 : i32
    %1 = arith.extui %0 : i1 to i32
    %c0_i32_0 = arith.constant 0 : i32
    %2 = arith.cmpi ne, %1, %c0_i32_0 : i32
    scf.if %2 {
      %cst_66 = arith.constant 0.000000e+00 : f32
      %114 = vector.broadcast %cst_66 : f32 to vector<1x1xf32>
      %c0_67 = arith.constant 0 : index
      %c0_68 = arith.constant 0 : index
      %115 = vector.load %arg10[%c0_67, %c0_68] : memref<1x1xf32, #tpu.memory_space<vmem>>, vector<1x1xf32>
      tpu.vector_store %arg10[%c0_67, %c0_68], %114 {strides = array<i32>} : memref<1x1xf32, #tpu.memory_space<vmem>>, vector<1x1xf32>,
      %c0_69 = arith.constant 0 : index
      %c0_70 = arith.constant 0 : index
      %116 = vector.load %arg4[%c0_69, %c0_70] : memref<128x3xf32, #tpu.memory_space<vmem>>, vector<128x1xf32>
      %117 = arith.index_cast %arg0 : i32 to index
      %c0_71 = arith.constant 0 : index
      %118 = memref.load %arg8[%117, %c0_71] : memref<1x3xf32, #tpu.memory_space<smem>>
      %119 = vector.broadcast %118 : f32 to vector<128x1xf32>
      %120 = arith.mulf %116, %119 : vector<128x1xf32>
      %c0_72 = arith.constant 0 : index
      %c1_73 = arith.constant 1 : index
      %121 = vector.load %arg4[%c0_72, %c1_73] : memref<128x3xf32, #tpu.memory_space<vmem>>, vector<128x1xf32>
      %122 = arith.index_cast %arg0 : i32 to index
      %c1_74 = arith.constant 1 : index
      %123 = memref.load %arg8[%122, %c1_74] : memref<1x3xf32, #tpu.memory_space<smem>>
      %124 = vector.broadcast %123 : f32 to vector<128x1xf32>
      %125 = arith.mulf %121, %124 : vector<128x1xf32>
      %126 = arith.addf %120, %125 : vector<128x1xf32>
      %c0_75 = arith.constant 0 : index
      %c2_76 = arith.constant 2 : index
      %127 = vector.load %arg4[%c0_75, %c2_76] : memref<128x3xf32, #tpu.memory_space<vmem>>, vector<128x1xf32>
      %128 = arith.index_cast %arg0 : i32 to index
      %c2_77 = arith.constant 2 : index
      %129 = memref.load %arg8[%128, %c2_77] : memref<1x3xf32, #tpu.memory_space<smem>>
      %130 = vector.broadcast %129 : f32 to vector<128x1xf32>
      %131 = arith.mulf %127, %130 : vector<128x1xf32>
      %132 = arith.addf %126, %131 : vector<128x1xf32>
      %c0_78 = arith.constant 0 : index
      %c0_79 = arith.constant 0 : index
      %133 = vector.load %arg11[%c0_78, %c0_79] : memref<128x1xf32, #tpu.memory_space<vmem>>, vector<128x1xf32>
      tpu.vector_store %arg11[%c0_78, %c0_79], %132 {strides = array<i32>} : memref<128x1xf32, #tpu.memory_space<vmem>>, vector<128x1xf32>,
    } else {
    }
    %c0 = arith.constant 0 : index
    %c0_1 = arith.constant 0 : index
    %3 = vector.load %arg4[%c0, %c0_1] : memref<128x3xf32, #tpu.memory_space<vmem>>, vector<128x1xf32>
    %c0_2 = arith.constant 0 : index
    %c0_3 = arith.constant 0 : index
    %4 = vector.load %arg2[%c0_2, %c0_3] : memref<3x128xf32, #tpu.memory_space<vmem>>, vector<1x128xf32>
    %5 = vector.broadcast %3 : vector<128x1xf32> to vector<128x128xf32>
    %6 = vector.broadcast %4 : vector<1x128xf32> to vector<128x128xf32>
    %7 = arith.mulf %5, %6 : vector<128x128xf32>
    %c0_4 = arith.constant 0 : index
    %c1 = arith.constant 1 : index
    %8 = vector.load %arg4[%c0_4, %c1] : memref<128x3xf32, #tpu.memory_space<vmem>>, vector<128x1xf32>
    %c1_5 = arith.constant 1 : index
    %c0_6 = arith.constant 0 : index
    %9 = vector.load %arg2[%c1_5, %c0_6] : memref<3x128xf32, #tpu.memory_space<vmem>>, vector<1x128xf32>
    %10 = vector.broadcast %8 : vector<128x1xf32> to vector<128x128xf32>
    %11 = vector.broadcast %9 : vector<1x128xf32> to vector<128x128xf32>
    %12 = arith.mulf %10, %11 : vector<128x128xf32>
    %13 = arith.addf %7, %12 : vector<128x128xf32>
    %c0_7 = arith.constant 0 : index
    %c2 = arith.constant 2 : index
    %14 = vector.load %arg4[%c0_7, %c2] : memref<128x3xf32, #tpu.memory_space<vmem>>, vector<128x1xf32>
    %c2_8 = arith.constant 2 : index
    %c0_9 = arith.constant 0 : index
    %15 = vector.load %arg2[%c2_8, %c0_9] : memref<3x128xf32, #tpu.memory_space<vmem>>, vector<1x128xf32>
    %16 = vector.broadcast %14 : vector<128x1xf32> to vector<128x128xf32>
    %17 = vector.broadcast %15 : vector<1x128xf32> to vector<128x128xf32>
    %18 = arith.mulf %16, %17 : vector<128x128xf32>
    %19 = arith.addf %13, %18 : vector<128x128xf32>
    %c0_10 = arith.constant 0 : index
    %c0_11 = arith.constant 0 : index
    %20 = vector.load %arg5[%c0_10, %c0_11] : memref<128x5xf32, #tpu.memory_space<vmem>>, vector<128x1xf32>
    %c0_12 = arith.constant 0 : index
    %c0_13 = arith.constant 0 : index
    %21 = vector.load %arg3[%c0_12, %c0_13] : memref<5x128xf32, #tpu.memory_space<vmem>>, vector<1x128xf32>
    %22 = vector.broadcast %20 : vector<128x1xf32> to vector<128x128xf32>
    %23 = vector.broadcast %21 : vector<1x128xf32> to vector<128x128xf32>
    %24 = arith.mulf %22, %23 : vector<128x128xf32>
    %c0_14 = arith.constant 0 : index
    %c1_15 = arith.constant 1 : index
    %25 = vector.load %arg5[%c0_14, %c1_15] : memref<128x5xf32, #tpu.memory_space<vmem>>, vector<128x1xf32>
    %c1_16 = arith.constant 1 : index
    %c0_17 = arith.constant 0 : index
    %26 = vector.load %arg3[%c1_16, %c0_17] : memref<5x128xf32, #tpu.memory_space<vmem>>, vector<1x128xf32>
    %27 = vector.broadcast %25 : vector<128x1xf32> to vector<128x128xf32>
    %28 = vector.broadcast %26 : vector<1x128xf32> to vector<128x128xf32>
    %29 = arith.mulf %27, %28 : vector<128x128xf32>
    %30 = arith.addf %24, %29 : vector<128x128xf32>
    %c0_18 = arith.constant 0 : index
    %c2_19 = arith.constant 2 : index
    %31 = vector.load %arg5[%c0_18, %c2_19] : memref<128x5xf32, #tpu.memory_space<vmem>>, vector<128x1xf32>
    %c2_20 = arith.constant 2 : index
    %c0_21 = arith.constant 0 : index
    %32 = vector.load %arg3[%c2_20, %c0_21] : memref<5x128xf32, #tpu.memory_space<vmem>>, vector<1x128xf32>
    %33 = vector.broadcast %31 : vector<128x1xf32> to vector<128x128xf32>
    %34 = vector.broadcast %32 : vector<1x128xf32> to vector<128x128xf32>
    %35 = arith.mulf %33, %34 : vector<128x128xf32>
    %36 = arith.addf %30, %35 : vector<128x128xf32>
    %c0_22 = arith.constant 0 : index
    %c3 = arith.constant 3 : index
    %37 = vector.load %arg5[%c0_22, %c3] : memref<128x5xf32, #tpu.memory_space<vmem>>, vector<128x1xf32>
    %c3_23 = arith.constant 3 : index
    %c0_24 = arith.constant 0 : index
    %38 = vector.load %arg3[%c3_23, %c0_24] : memref<5x128xf32, #tpu.memory_space<vmem>>, vector<1x128xf32>
    %39 = vector.broadcast %37 : vector<128x1xf32> to vector<128x128xf32>
    %40 = vector.broadcast %38 : vector<1x128xf32> to vector<128x128xf32>
    %41 = arith.mulf %39, %40 : vector<128x128xf32>
    %42 = arith.addf %36, %41 : vector<128x128xf32>
    %c0_25 = arith.constant 0 : index
    %c4 = arith.constant 4 : index
    %43 = vector.load %arg5[%c0_25, %c4] : memref<128x5xf32, #tpu.memory_space<vmem>>, vector<128x1xf32>
    %c4_26 = arith.constant 4 : index
    %c0_27 = arith.constant 0 : index
    %44 = vector.load %arg3[%c4_26, %c0_27] : memref<5x128xf32, #tpu.memory_space<vmem>>, vector<1x128xf32>
    %45 = vector.broadcast %43 : vector<128x1xf32> to vector<128x128xf32>
    %46 = vector.broadcast %44 : vector<1x128xf32> to vector<128x128xf32>
    %47 = arith.mulf %45, %46 : vector<128x128xf32>
    %48 = arith.addf %42, %47 : vector<128x128xf32>
    %c0_28 = arith.constant 0 : index
    %c0_29 = arith.constant 0 : index
    %49 = vector.load %arg7[%c0_28, %c0_29] : memref<128x4xf32, #tpu.memory_space<vmem>>, vector<128x1xf32>
    %50 = vector.broadcast %49 : vector<128x1xf32> to vector<128x128xf32>
    %51 = arith.addf %48, %50 : vector<128x128xf32>
    %52 = arith.addf %19, %51 : vector<128x128xf32>
    %cst = arith.constant 0.000000e+00 : f32
    %53 = vector.broadcast %cst : f32 to vector<128x128xf32>
    %54 = arith.maximumf %52, %53 : vector<128x128xf32>
    %c0_30 = arith.constant 0 : index
    %c0_31 = arith.constant 0 : index
    %55 = vector.load %arg12[%c0_30, %c0_31] : memref<128x256xf32, #tpu.memory_space<vmem>>, vector<128x128xf32>
    tpu.vector_store %arg12[%c0_30, %c0_31], %54 {strides = array<i32>} : memref<128x256xf32, #tpu.memory_space<vmem>>, vector<128x128xf32>,
    %c1_i32 = arith.constant 1 : i32
    %56 = tpu.dynamic_rotate %19 by %c1_i32 dim 1 : vector<128x128xf32>, i32 -> vector<128x128xf32>
    %57 = arith.addf %56, %51 : vector<128x128xf32>
    %cst_32 = arith.constant 0.000000e+00 : f32
    %58 = vector.broadcast %cst_32 : f32 to vector<128x128xf32>
    %59 = arith.maximumf %57, %58 : vector<128x128xf32>
    %c0_33 = arith.constant 0 : index
    %c128 = arith.constant 128 : index
    %60 = vector.load %arg12[%c0_33, %c128] : memref<128x256xf32, #tpu.memory_space<vmem>>, vector<128x128xf32>
    tpu.vector_store %arg12[%c0_33, %c128], %59 {strides = array<i32>} : memref<128x256xf32, #tpu.memory_space<vmem>>, vector<128x128xf32>,
    %c0_34 = arith.constant 0 : index
    %c0_35 = arith.constant 0 : index
    %61 = vector.load %arg11[%c0_34, %c0_35] : memref<128x1xf32, #tpu.memory_space<vmem>>, vector<128x1xf32>
    %62 = vector.extract_strided_slice %51 {offsets = [0, 0], sizes = [128, 1], strides = [1, 1]} : vector<128x128xf32> to vector<128x1xf32>
    %63 = arith.addf %61, %62 : vector<128x1xf32>
    %cst_36 = arith.constant 0.000000e+00 : f32
    %64 = vector.broadcast %cst_36 : f32 to vector<128x1xf32>
    %65 = arith.maximumf %63, %64 : vector<128x1xf32>
    %c0_37 = arith.constant 0 : index
    %c128_38 = arith.constant 128 : index
    %66 = vector.load %arg12[%c0_37, %c128_38] : memref<128x256xf32, #tpu.memory_space<vmem>>, vector<128x1xf32>
    tpu.vector_store %arg12[%c0_37, %c128_38], %65 {strides = array<i32>} : memref<128x256xf32, #tpu.memory_space<vmem>>, vector<128x1xf32>,
    %67 = vector.extract_strided_slice %19 {offsets = [0, 127], sizes = [128, 1], strides = [1, 1]} : vector<128x128xf32> to vector<128x1xf32>
    %c0_39 = arith.constant 0 : index
    %c0_40 = arith.constant 0 : index
    %68 = vector.load %arg11[%c0_39, %c0_40] : memref<128x1xf32, #tpu.memory_space<vmem>>, vector<128x1xf32>
    tpu.vector_store %arg11[%c0_39, %c0_40], %67 {strides = array<i32>} : memref<128x1xf32, #tpu.memory_space<vmem>>, vector<128x1xf32>,
    %c0_41 = arith.constant 0 : index
    %c0_42 = arith.constant 0 : index
    %69 = vector.load %arg6[%c0_41, %c0_42] : memref<128x128xf32, #tpu.memory_space<vmem>>, vector<128x128xf32>
    %c0_43 = arith.constant 0 : index
    %c0_44 = arith.constant 0 : index
    %70 = vector.load %arg12[%c0_43, %c0_44] : memref<128x256xf32, #tpu.memory_space<vmem>>, vector<128x256xf32>
    %cst_45 = arith.constant dense<0.000000e+00> : vector<128x256xf32>
    %71 = tpu.matmul %69, %70, %cst_45 {dimension_numbers = #tpu.dot_dimension_numbers<[1], [0], [0], [1], [0, 0, 1, 1], [], []>} : vector<128x128xf32>, vector<128x256xf32>, vector<128x256xf32> -> vector<128x256xf32>
    %c0_46 = arith.constant 0 : index
    %c1_47 = arith.constant 1 : index
    %72 = vector.load %arg7[%c0_46, %c1_47] : memref<128x4xf32, #tpu.memory_space<vmem>>, vector<128x1xf32>
    %73 = vector.broadcast %72 : vector<128x1xf32> to vector<128x256xf32>
    %74 = arith.addf %71, %73 : vector<128x256xf32>
    %cst_48 = arith.constant 0.000000e+00 : f32
    %75 = vector.broadcast %cst_48 : f32 to vector<128x256xf32>
    %76 = arith.maximumf %74, %75 : vector<128x256xf32>
    %c0_49 = arith.constant 0 : index
    %c2_50 = arith.constant 2 : index
    %77 = vector.load %arg7[%c0_49, %c2_50] : memref<128x4xf32, #tpu.memory_space<vmem>>, vector<128x1xf32>
    %78 = vector.broadcast %77 : vector<128x1xf32> to vector<128x256xf32>
    %79 = arith.mulf %76, %78 : vector<128x256xf32>
    %cst_51 = arith.constant dense<0.000000e+00> : vector<256xf32>
    %80 = vector.multi_reduction <add>, %79, %cst_51 [0] : vector<128x256xf32> to vector<256xf32>
    %81 = vector.shape_cast %80 : vector<256xf32> to vector<1x256xf32>
    %c0_52 = arith.constant 0 : index
    %c3_53 = arith.constant 3 : index
    %82 = vector.load %arg7[%c0_52, %c3_53] : memref<128x4xf32, #tpu.memory_space<vmem>>, vector<1x1xf32>
    %83 = vector.broadcast %82 : vector<1x1xf32> to vector<1x256xf32>
    %84 = arith.addf %81, %83 : vector<1x256xf32>
    %85 = vector.extract_strided_slice %84 {offsets = [0, 0], sizes = [1, 128], strides = [1, 1]} : vector<1x256xf32> to vector<1x128xf32>
    %cst_54 = arith.constant 0.000000e+00 : f32
    %86 = vector.broadcast %cst_54 : f32 to vector<1x128xf32>
    %87 = arith.subf %86, %85 : vector<1x128xf32>
    %cst_55 = arith.constant 0.000000e+00 : f32
    %88 = vector.broadcast %cst_55 : f32 to vector<1x128xf32>
    %89 = arith.maximumf %87, %88 : vector<1x128xf32>
    %90 = math.absf %87 : vector<1x128xf32>
    %cst_56 = arith.constant 0.000000e+00 : f32
    %91 = vector.broadcast %cst_56 : f32 to vector<1x128xf32>
    %92 = arith.subf %91, %90 : vector<1x128xf32>
    %93 = math.exp %92 : vector<1x128xf32>
    %94 = math.log1p %93 : vector<1x128xf32>
    %95 = arith.addf %89, %94 : vector<1x128xf32>
    %96 = vector.extract_strided_slice %84 {offsets = [0, 128], sizes = [1, 128], strides = [1, 1]} : vector<1x256xf32> to vector<1x128xf32>
    %cst_57 = arith.constant 0.000000e+00 : f32
    %97 = vector.broadcast %cst_57 : f32 to vector<1x128xf32>
    %98 = arith.maximumf %96, %97 : vector<1x128xf32>
    %99 = math.absf %96 : vector<1x128xf32>
    %cst_58 = arith.constant 0.000000e+00 : f32
    %100 = vector.broadcast %cst_58 : f32 to vector<1x128xf32>
    %101 = arith.subf %100, %99 : vector<1x128xf32>
    %102 = math.exp %101 : vector<1x128xf32>
    %103 = math.log1p %102 : vector<1x128xf32>
    %104 = arith.addf %98, %103 : vector<1x128xf32>
    %105 = arith.addf %95, %104 : vector<1x128xf32>
    %c0_59 = arith.constant 0 : index
    %c0_60 = arith.constant 0 : index
    %106 = vector.load %arg10[%c0_59, %c0_60] : memref<1x1xf32, #tpu.memory_space<vmem>>, vector<1x1xf32>
    %cst_61 = arith.constant dense<0.000000e+00> : vector<1xf32>
    %107 = vector.multi_reduction <add>, %105, %cst_61 [1] : vector<1x128xf32> to vector<1xf32>
    %108 = vector.shape_cast %107 : vector<1xf32> to vector<1x1xf32>
    %109 = arith.addf %106, %108 : vector<1x1xf32>
    %c0_62 = arith.constant 0 : index
    %c0_63 = arith.constant 0 : index
    %110 = vector.load %arg10[%c0_62, %c0_63] : memref<1x1xf32, #tpu.memory_space<vmem>>, vector<1x1xf32>
    tpu.vector_store %arg10[%c0_62, %c0_63], %109 {strides = array<i32>} : memref<1x1xf32, #tpu.memory_space<vmem>>, vector<1x1xf32>,
    %c1_i32_64 = arith.constant 1 : i32
    %111 = arith.cmpi eq, %arg1, %c1_i32_64 : i32
    %112 = arith.extui %111 : i1 to i32
    %c0_i32_65 = arith.constant 0 : i32
    %113 = arith.cmpi ne, %112, %c0_i32_65 : i32
    scf.if %113 {
      %c0_66 = arith.constant 0 : index
      %c0_67 = arith.constant 0 : index
      %114 = vector.load %arg10[%c0_66, %c0_67] : memref<1x1xf32, #tpu.memory_space<vmem>>, vector<1x1xf32>
      %cst_68 = arith.constant 0.001953125 : f32
      %115 = vector.broadcast %cst_68 : f32 to vector<1x1xf32>
      %116 = arith.mulf %114, %115 : vector<1x1xf32>
      %117 = vector.shape_cast %116 : vector<1x1xf32> to vector<1x1xf32>
      %118 = vector.broadcast %117 : vector<1x1xf32> to vector<8x128xf32>
      %c0_69 = arith.constant 0 : index
      %c0_70 = arith.constant 0 : index
      %119 = vector.load %arg9[%c0_69, %c0_70] : memref<8x128xf32, #tpu.memory_space<vmem>>, vector<8x128xf32>
      tpu.vector_store %arg9[%c0_69, %c0_70], %118 {strides = array<i32>} : memref<8x128xf32, #tpu.memory_space<vmem>>, vector<8x128xf32>,
    } else {
    }
    return
  }
  func.func @transform_0(%arg0: i32, %arg1: i32) -> (i32, i32) {
    %c2_i32 = arith.constant 2 : i32
    %0 = arith.muli %arg0, %c2_i32 : i32
    %1 = arith.addi %0, %arg1 : i32
    %c0_i32 = arith.constant 0 : i32
    %c0_i32_0 = arith.constant 0 : i32
    return %c0_i32, %1 : i32, i32
  }
  func.func @transform_1(%arg0: i32, %arg1: i32) -> (i32, i32) {
    %c2_i32 = arith.constant 2 : i32
    %0 = arith.muli %arg0, %c2_i32 : i32
    %1 = arith.addi %0, %arg1 : i32
    %c0_i32 = arith.constant 0 : i32
    %c0_i32_0 = arith.constant 0 : i32
    return %c0_i32, %1 : i32, i32
  }
  func.func @transform_2(%arg0: i32, %arg1: i32) -> (i32, i32) {
    %c0_i32 = arith.constant 0 : i32
    %c0_i32_0 = arith.constant 0 : i32
    %c0_i32_1 = arith.constant 0 : i32
    return %c0_i32, %c0_i32_0 : i32, i32
  }
  func.func @transform_3(%arg0: i32, %arg1: i32) -> (i32, i32) {
    %c0_i32 = arith.constant 0 : i32
    %c0_i32_0 = arith.constant 0 : i32
    %c0_i32_1 = arith.constant 0 : i32
    return %c0_i32, %c0_i32_0 : i32, i32
  }
  func.func @transform_4(%arg0: i32, %arg1: i32) -> (i32, i32) {
    %c0_i32 = arith.constant 0 : i32
    %c0_i32_0 = arith.constant 0 : i32
    %c0_i32_1 = arith.constant 0 : i32
    return %c0_i32, %c0_i32_0 : i32, i32
  }
  func.func @transform_5(%arg0: i32, %arg1: i32) -> (i32, i32) {
    %c0_i32 = arith.constant 0 : i32
    %c0_i32_0 = arith.constant 0 : i32
    %c0_i32_1 = arith.constant 0 : i32
    return %c0_i32, %c0_i32_0 : i32, i32
  }
  func.func @transform_6(%arg0: i32, %arg1: i32) -> (i32, i32) {
    %c0_i32 = arith.constant 0 : i32
    %c0_i32_0 = arith.constant 0 : i32
    %c0_i32_1 = arith.constant 0 : i32
    return %c0_i32, %c0_i32_0 : i32, i32
  }
  func.func @transform_7(%arg0: i32, %arg1: i32) -> (i32, i32) {
    %c0_i32 = arith.constant 0 : i32
    %c0_i32_0 = arith.constant 0 : i32
    return %arg0, %c0_i32 : i32, i32
  }
}

</mosaic_0001>

<llo_original>
// kernel: tpu_custom_call.1
$region0: #{tpu_custom_call.1}
  #allocation0 [shape = 'u32[]', space=smem, size = 0x4, offset = 0x4, fixed_abs, tag = 'smem constant byte address 0x4 - core index']
  #allocation1 [shape = 'u32[144,128]{1,0:T(1,128)}', space=vmem, size = 0x12000, scoped, tag = 'internal scratch']
  #allocation2 [shape = 'f32[1,1]{1,0:T(1,128)}', space=vmem, size = 0x200, scoped, tag = 'scratch operand']
  #allocation3 [shape = 'f32[128,1]{1,0:T(8,128)}', space=vmem, size = 0x10000, scoped, tag = 'scratch operand']
  #allocation4 [shape = 'f32[128,256]{1,0:T(8,128)}', space=vmem, size = 0x20000, scoped, tag = 'scratch operand']
  %s0 = inlined_call_operand.vmem [shape: f32[3,256], index: 0, kind: input, shape index: {}]
  %s1 = inlined_call_operand.vmem [shape: f32[5,256], index: 1, kind: input, shape index: {}]
  %s2 = inlined_call_operand.vmem [shape: f32[128,3], index: 2, kind: input, shape index: {}]
  %s3 = inlined_call_operand.vmem [shape: f32[128,5], index: 3, kind: input, shape index: {}]
  %s4 = inlined_call_operand.vmem [shape: f32[128,128], index: 4, kind: input, shape index: {}]
  %s5 = inlined_call_operand.vmem [shape: f32[128,4], index: 5, kind: input, shape index: {}]
  %s6 = inlined_call_operand.vmem [shape: f32[1,3], index: 6, kind: input, shape index: {}]
  %s7 = inlined_call_operand.hbm [shape: f32[8,128], index: 7, kind: output, shape index: {}]
  %s8 = sld [smem:[#allocation0]]
  $region73: #{tpu_custom_call.1} parent=0
    _
  %s10 = ssub.s32 1, %s8
  %s11 = scalar_select 0, %s10, %s8
  $region1: #{tpu_custom_call.1} parent=0
    #allocation5 [shape = 'u8[512]{0}', space=smem, size = 0x200, scoped, tag = 'input window, operand 6, single buffered']
    #allocation6 [shape = 's32[2]{0}', space=sflag, size = 0x8, scoped, tag = 'scoped memory for tpu_custom_call.1']
    #allocation7 [shape = 's32[2]{0}', space=sflag, size = 0x8, scoped, tag = 'scoped memory for tpu_custom_call.1']
    #allocation8 [shape = 'u8[4096]{0}', space=vmem, size = 0x1000, scoped, tag = 'output window, operand 0, single buffered']
    %12 = vsyncpa [#allocation7], 0
    %13 = vsyncpa [#allocation6], 0
    loop: start=0, step=1, limit=4
    $region2: #{tpu_custom_call.1} parent=1 // loop_pre_header
      _
    $region3: #{tpu_custom_call.1} parent=1 // loop_header
      %s15 = sphi 0, %s19
      %p16 = scmp.ge.s32.totalorder %s15, 4
      %s22 = sphi 0, %s34
      %s23 = sphi 0, %s30
      %s24 = sphi 0, %s22
      %s25 = sphi 0, %s23
      %s26 = sphi 0, %s24
      %s27 = sphi 0, %s25
      %s41 = sphi 0, %s43
      %s44 = sphi 0, %s41
      %s45 = sphi 0, %s44
      %s61 = sphi 0, %s45
      %s71 = sphi 0, %s73
      %s74 = sphi 0, %s71
      %s75 = sphi 0, %s74
      %s91 = sphi 0, %s75
      %s95 = sphi 0, %s95
      %s97 = sphi 0, %s95
      %s98 = sphi 0, %s97
      %s112 = sphi 0, %s98
      %s116 = sphi 0, %s116
      %s118 = sphi 0, %s116
      %s119 = sphi 0, %s118
      %s133 = sphi 0, %s119
      %s137 = sphi 0, %s137
      %s139 = sphi 0, %s137
      %s140 = sphi 0, %s139
      %s154 = sphi 0, %s140
      %s158 = sphi 0, %s158
      %s160 = sphi 0, %s158
      %s161 = sphi 0, %s160
      %s175 = sphi 0, %s161
      %s179 = sphi 0, %s179
      %s181 = sphi 0, %s179
      %s182 = sphi 0, %s181
      %s196 = sphi 0, %s182
      %s202 = sphi 0, %s204
      %s205 = sphi 0, %s202
      %s206 = sphi 0, %s205
      %s222 = sphi 0, %s206
    $region4: #{tpu_custom_call.1} parent=1 // loop_header_branch
      %18 = sbr.rel (%p16) target = $region8
    $region5: #{tpu_custom_call.1} parent=1 // loop_body
      %s20 = ssub.s32 %s15, 1
      %s21 = ssub.s32 %s15, 2
      %s28 = sadd.s32 1, %s23
      %p29 = scmp.ge.s32.totalorder %s28, 2
      %s30 = scalar_select %p29, 0, %s28
      %s31 = sadd.s32 1, %s22
      %s32 = scalar_select %p29, %s31, %s22
      %p33 = scmp.ge.s32.totalorder %s32, 1
      %s34 = scalar_select %p33, 0, %s32
      %s35 = smul.u32 %s22, 2
      %s36 = sadd.s32 %s35, %s23
      %s37 = smul.u32 %s34, 2
      %s38 = sadd.s32 %s37, %s30
      %s39 = ssub.s32 %s36, %s38
      %p40 = scmp.eq.s32.totalorder %s39, 0
      %s42 = sadd.s32 %s41, 1
      %s43 = scalar_select %p40, %s41, %s42
      %p46 = pneg %p40
      %p47 = scmp.eq.s32.totalorder %s15, 1
      %p48 = por %p46, %p47
      %p49 = scmp.ne.s32.totalorder %s41, %s44
      %p50 = scmp.eq.s32.totalorder %s15, 0
      %p51 = por %p49, %p50
      %p52 = scmp.ne.s32.totalorder %s41, %s44
      %p53 = scmp.eq.s32.totalorder %s20, 1
      %p54 = por %p52, %p53
      %p55 = scmp.ne.s32.totalorder %s44, %s45
      %p56 = scmp.eq.s32.totalorder %s20, 0
      %p57 = por %p55, %p56
      %p58 = scmp.ne.s32.totalorder %s44, %s45
      %p59 = scmp.eq.s32.totalorder %s21, 1
      %p60 = por %p58, %p59
      %p62 = scmp.ne.s32.totalorder %s45, %s61
      %p63 = scmp.eq.s32.totalorder %s21, 0
      %p64 = por %p62, %p63
      %s65 = smul.u32 %s22, 2
      %s66 = sadd.s32 %s65, %s23
      %s67 = smul.u32 %s34, 2
      %s68 = sadd.s32 %s67, %s30
      %s69 = ssub.s32 %s66, %s68
      %p70 = scmp.eq.s32.totalorder %s69, 0
      %s72 = sadd.s32 %s71, 1
      %s73 = scalar_select %p70, %s71, %s72
      %p76 = pneg %p70
      %p77 = scmp.eq.s32.totalorder %s15, 1
      %p78 = por %p76, %p77
      %p79 = scmp.ne.s32.totalorder %s71, %s74
      %p80 = scmp.eq.s32.totalorder %s15, 0
      %p81 = por %p79, %p80
      %p82 = scmp.ne.s32.totalorder %s71, %s74
      %p83 = scmp.eq.s32.totalorder %s20, 1
      %p84 = por %p82, %p83
      %p85 = scmp.ne.s32.totalorder %s74, %s75
      %p86 = scmp.eq.s32.totalorder %s20, 0
      %p87 = por %p85, %p86
      %p88 = scmp.ne.s32.totalorder %s74, %s75
      %p89 = scmp.eq.s32.totalorder %s21, 1
      %p90 = por %p88, %p89
      %p92 = scmp.ne.s32.totalorder %s75, %s91
      %p93 = scmp.eq.s32.totalorder %s21, 0
      %p94 = por %p92, %p93
      %s96 = sadd.s32 %s95, 1
      %p99 = scmp.eq.s32.totalorder %s15, 1
      %p100 = scmp.ne.s32.totalorder %s95, %s97
      %p101 = scmp.eq.s32.totalorder %s15, 0
      %p102 = por %p100, %p101
      %p103 = scmp.ne.s32.totalorder %s95, %s97
      %p104 = scmp.eq.s32.totalorder %s20, 1
      %p105 = por %p103, %p104
      %p106 = scmp.ne.s32.totalorder %s97, %s98
      %p107 = scmp.eq.s32.totalorder %s20, 0
      %p108 = por %p106, %p107
      %p109 = scmp.ne.s32.totalorder %s97, %s98
      %p110 = scmp.eq.s32.totalorder %s21, 1
      %p111 = por %p109, %p110
      %p113 = scmp.ne.s32.totalorder %s98, %s112
      %p114 = scmp.eq.s32.totalorder %s21, 0
      %p115 = por %p113, %p114
      %s117 = sadd.s32 %s116, 1
      %p120 = scmp.eq.s32.totalorder %s15, 1
      %p121 = scmp.ne.s32.totalorder %s116, %s118
      %p122 = scmp.eq.s32.totalorder %s15, 0
      %p123 = por %p121, %p122
      %p124 = scmp.ne.s32.totalorder %s116, %s118
      %p125 = scmp.eq.s32.totalorder %s20, 1
      %p126 = por %p124, %p125
      %p127 = scmp.ne.s32.totalorder %s118, %s119
      %p128 = scmp.eq.s32.totalorder %s20, 0
      %p129 = por %p127, %p128
      %p130 = scmp.ne.s32.totalorder %s118, %s119
      %p131 = scmp.eq.s32.totalorder %s21, 1
      %p132 = por %p130, %p131
      %p134 = scmp.ne.s32.totalorder %s119, %s133
      %p135 = scmp.eq.s32.totalorder %s21, 0
      %p136 = por %p134, %p135
      %s138 = sadd.s32 %s137, 1
      %p141 = scmp.eq.s32.totalorder %s15, 1
      %p142 = scmp.ne.s32.totalorder %s137, %s139
      %p143 = scmp.eq.s32.totalorder %s15, 0
      %p144 = por %p142, %p143
      %p145 = scmp.ne.s32.totalorder %s137, %s139
      %p146 = scmp.eq.s32.totalorder %s20, 1
      %p147 = por %p145, %p146
      %p148 = scmp.ne.s32.totalorder %s139, %s140
      %p149 = scmp.eq.s32.totalorder %s20, 0
      %p150 = por %p148, %p149
      %p151 = scmp.ne.s32.totalorder %s139, %s140
      %p152 = scmp.eq.s32.totalorder %s21, 1
      %p153 = por %p151, %p152
      %p155 = scmp.ne.s32.totalorder %s140, %s154
      %p156 = scmp.eq.s32.totalorder %s21, 0
      %p157 = por %p155, %p156
      %s159 = sadd.s32 %s158, 1
      %p162 = scmp.eq.s32.totalorder %s15, 1
      %p163 = scmp.ne.s32.totalorder %s158, %s160
      %p164 = scmp.eq.s32.totalorder %s15, 0
      %p165 = por %p163, %p164
      %p166 = scmp.ne.s32.totalorder %s158, %s160
      %p167 = scmp.eq.s32.totalorder %s20, 1
      %p168 = por %p166, %p167
      %p169 = scmp.ne.s32.totalorder %s160, %s161
      %p170 = scmp.eq.s32.totalorder %s20, 0
      %p171 = por %p169, %p170
      %p172 = scmp.ne.s32.totalorder %s160, %s161
      %p173 = scmp.eq.s32.totalorder %s21, 1
      %p174 = por %p172, %p173
      %p176 = scmp.ne.s32.totalorder %s161, %s175
      %p177 = scmp.eq.s32.totalorder %s21, 0
      %p178 = por %p176, %p177
      %s180 = sadd.s32 %s179, 1
      %p183 = scmp.eq.s32.totalorder %s15, 1
      %p184 = scmp.ne.s32.totalorder %s179, %s181
      %p185 = scmp.eq.s32.totalorder %s15, 0
      %p186 = por %p184, %p185
      %p187 = scmp.ne.s32.totalorder %s179, %s181
      %p188 = scmp.eq.s32.totalorder %s20, 1
      %p189 = por %p187, %p188
      %p190 = scmp.ne.s32.totalorder %s181, %s182
      %p191 = scmp.eq.s32.totalorder %s20, 0
      %p192 = por %p190, %p191
      %p193 = scmp.ne.s32.totalorder %s181, %s182
      %p194 = scmp.eq.s32.totalorder %s21, 1
      %p195 = por %p193, %p194
      %p197 = scmp.ne.s32.totalorder %s182, %s196
      %p198 = scmp.eq.s32.totalorder %s21, 0
      %p199 = por %p197, %p198
      %s200 = ssub.s32 %s22, %s34
      %p201 = scmp.eq.s32.totalorder %s200, 0
      %s203 = sadd.s32 %s202, 1
      %s204 = scalar_select %p201, %s202, %s203
      %p207 = pneg %p201
      %p208 = scmp.eq.s32.totalorder %s15, 1
      %p209 = por %p207, %p208
      %p210 = scmp.ne.s32.totalorder %s202, %s205
      %p211 = scmp.eq.s32.totalorder %s15, 0
      %p212 = por %p210, %p211
      %p213 = scmp.ne.s32.totalorder %s202, %s205
      %p214 = scmp.eq.s32.totalorder %s20, 1
      %p215 = por %p213, %p214
      %p216 = scmp.ne.s32.totalorder %s205, %s206
      %p217 = scmp.eq.s32.totalorder %s20, 0
      %p218 = por %p216, %p217
      %p219 = scmp.ne.s32.totalorder %s205, %s206
      %p220 = scmp.eq.s32.totalorder %s21, 1
      %p221 = por %p219, %p220
      %p223 = scmp.ne.s32.totalorder %s206, %s222
      %p224 = scmp.eq.s32.totalorder %s21, 0
      %p225 = por %p223, %p224
      %p226 = scmp.le.s32.totalorder 1, %s15
      %p227 = scmp.lt.s32.totalorder %s15, 3
      %p228 = pnand %p226, %p227
      %p229 = pneg %p228
      // Predicated region
      $region9: #{tpu_custom_call.1} parent=5 // pred_check
        _
      $region10: #{tpu_custom_call.1} parent=5 // pred_check_branch
        %231 = sbr.rel (%p228) target = $region12
      $region11: #{tpu_custom_call.1} parent=5 // pred_region
        %s232 = ssub.s32 %s15, 1
        // Predicated region
        $region13: #{tpu_custom_call.1} parent=11 // pred_check
          %p233 = pneg %p108
        $region14: #{tpu_custom_call.1} parent=11 // pred_check_branch
          %235 = sbr.rel (%p233) target = $region16
        $region15: #{tpu_custom_call.1} parent=11 // pred_region
          _
        $region16: #{tpu_custom_call.1} parent=11 // pred_fallthru
          _
        // Predicated region
        $region17: #{tpu_custom_call.1} parent=11 // pred_check
          %p236 = pneg %p129
        $region18: #{tpu_custom_call.1} parent=11 // pred_check_branch
          %238 = sbr.rel (%p236) target = $region20
        $region19: #{tpu_custom_call.1} parent=11 // pred_region
          _
        $region20: #{tpu_custom_call.1} parent=11 // pred_fallthru
          _
        // Predicated region
        $region21: #{tpu_custom_call.1} parent=11 // pred_check
          %p239 = pneg %p150
        $region22: #{tpu_custom_call.1} parent=11 // pred_check_branch
          %241 = sbr.rel (%p239) target = $region24
        $region23: #{tpu_custom_call.1} parent=11 // pred_region
          _
        $region24: #{tpu_custom_call.1} parent=11 // pred_fallthru
          _
        // Predicated region
        $region25: #{tpu_custom_call.1} parent=11 // pred_check
          %p242 = pneg %p171
        $region26: #{tpu_custom_call.1} parent=11 // pred_check_branch
          %244 = sbr.rel (%p242) target = $region28
        $region27: #{tpu_custom_call.1} parent=11 // pred_region
          _
        $region28: #{tpu_custom_call.1} parent=11 // pred_fallthru
          _
        // Predicated region
        $region29: #{tpu_custom_call.1} parent=11 // pred_check
          %p245 = pneg %p192
        $region30: #{tpu_custom_call.1} parent=11 // pred_check_branch
          %247 = sbr.rel (%p245) target = $region32
        $region31: #{tpu_custom_call.1} parent=11 // pred_region
          %s249 = ssub.s32 16, 16
          %250 = vsyncadd [#allocation7], %s249
          %s252 = sshll.u32 %s6, 4
          %s253 = int_to_ptr.vmem [resolvable:$true] %s252
          %255 = dma.vmem_to_smem %s253, 16, [#allocation5], [#allocation7]
        $region32: #{tpu_custom_call.1} parent=11 // pred_fallthru
          _
      $region12: #{tpu_custom_call.1} parent=5 // pred_fallthru
        _
      %p256 = scmp.lt.s32.totalorder %s15, 2
      // Predicated region
      $region33: #{tpu_custom_call.1} parent=5 // pred_check
        %p257 = pneg %p256
      $region34: #{tpu_custom_call.1} parent=5 // pred_check_branch
        %259 = sbr.rel (%p257) target = $region36
      $region35: #{tpu_custom_call.1} parent=5 // pred_region
        // Predicated region
        $region37: #{tpu_custom_call.1} parent=35 // pred_check
          %p260 = pneg %p51
        $region38: #{tpu_custom_call.1} parent=35 // pred_check_branch
          %262 = sbr.rel (%p260) target = $region40
        $region39: #{tpu_custom_call.1} parent=35 // pred_region
          %s263 = smul.u32 %s22, 2
          %s264 = sadd.s32 %s263, %s23
          %p265 = scmp.lt.s32.totalorder %s264, 1
          %s266 = scalar_select %p265, %s264, 1
          %s267 = smul.addr %s266, 4
          %s268 = scalar_lea.vmem %s0, %s267
          %s269 = smul.u32 %s22, 2
          %s270 = sadd.s32 %s269, %s23
        $region40: #{tpu_custom_call.1} parent=35 // pred_fallthru
          _
        // Predicated region
        $region41: #{tpu_custom_call.1} parent=35 // pred_check
          %p271 = pneg %p81
        $region42: #{tpu_custom_call.1} parent=35 // pred_check_branch
          %273 = sbr.rel (%p271) target = $region44
        $region43: #{tpu_custom_call.1} parent=35 // pred_region
          %s274 = smul.u32 %s22, 2
          %s275 = sadd.s32 %s274, %s23
          %p276 = scmp.lt.s32.totalorder %s275, 1
          %s277 = scalar_select %p276, %s275, 1
          %s278 = smul.addr %s277, 8
          %s279 = scalar_lea.vmem %s1, %s278
          %s280 = smul.u32 %s22, 2
          %s281 = sadd.s32 %s280, %s23
        $region44: #{tpu_custom_call.1} parent=35 // pred_fallthru
          _
      $region36: #{tpu_custom_call.1} parent=5 // pred_fallthru
        _
      %p282 = scmp.le.s32.totalorder 1, %s15
      %p283 = scmp.lt.s32.totalorder %s15, 3
      %p284 = pnand %p282, %p283
      %p285 = pneg %p284
      // Predicated region
      $region45: #{tpu_custom_call.1} parent=5 // pred_check
        _
      $region46: #{tpu_custom_call.1} parent=5 // pred_check_branch
        %287 = sbr.rel (%p284) target = $region48
      $region47: #{tpu_custom_call.1} parent=5 // pred_region
        %s288 = ssub.s32 %s15, 1
        // Predicated region
        $region49: #{tpu_custom_call.1} parent=47 // pred_check
          %p289 = pneg %p192
        $region50: #{tpu_custom_call.1} parent=47 // pred_check_branch
          %291 = sbr.rel (%p289) target = $region52
        $region51: #{tpu_custom_call.1} parent=47 // pred_region
          %292 = dma.done [#allocation7], 16
        $region52: #{tpu_custom_call.1} parent=47 // pred_fallthru
          _
        %293 = sfence
        %s294 = smul.u32 %s24, 2
        %s295 = sadd.s32 %s294, %s25
        %p296 = scmp.lt.s32.totalorder %s295, 1
        %s297 = scalar_select %p296, %s295, 1
        %s298 = smul.addr %s297, 4
        %s299 = scalar_lea.vmem %s0, %s298
        %p300 = pneg %p57
        %p301 = pneg %p54
        %s302 = smul.u32 %s24, 2
        %s303 = sadd.s32 %s302, %s25
        %p304 = scmp.lt.s32.totalorder %s303, 1
        %s305 = scalar_select %p304, %s303, 1
        %s306 = smul.addr %s305, 8
        %s307 = scalar_lea.vmem %s1, %s306
        %p308 = pneg %p87
        %p309 = pneg %p84
        %p310 = pneg %p108
        %p311 = pneg %p105
        %p312 = pneg %p129
        %p313 = pneg %p126
        %p314 = pneg %p150
        %p315 = pneg %p147
        %p316 = pneg %p171
        %p317 = pneg %p168
        %p318 = pneg %p192
        %p319 = pneg %p189
        %p320 = pneg %p218
        %p321 = pneg %p215
        %s322 = smul.u32 %s24, 2
        %s323 = sadd.s32 %s322, %s25
        %p324 = scmp.lt.s32.totalorder %s323, 1
        %s325 = scalar_select %p324, %s323, 1
        %s326 = smul.addr %s325, 4
        %s327 = scalar_lea.vmem %s0, %s326
        %s328 = smul.u32 %s24, 2
        %s329 = sadd.s32 %s328, %s25
        %s330 = smul.u32 %s24, 2
        %s331 = sadd.s32 %s330, %s25
        %p332 = scmp.lt.s32.totalorder %s331, 1
        %s333 = scalar_select %p332, %s331, 1
        %s334 = smul.addr %s333, 8
        %s335 = scalar_lea.vmem %s1, %s334
        %s336 = smul.u32 %s24, 2
        %s337 = sadd.s32 %s336, %s25
        %p338 = scmp.eq.s32.totalorder %s25, 0
        // Predicated region
        $region53: #{tpu_custom_call.1} parent=47 // pred_check
          %p339 = pneg %p338
        $region54: #{tpu_custom_call.1} parent=47 // pred_check_branch
          %341 = sbr.rel (%p339) target = $region56
        $region55: #{tpu_custom_call.1} parent=47 // pred_region
          %vm342 = vcmask 0
          %343 = vst.msk [vmem:[#allocation2] sm:$0x1] %vm342, 0.0
          %v344 = vld [vmem:[%s2] sm:$0xff]
          %v345 = vld [vmem:[%s2 + $0x8] sm:$0xff]
          %v346 = vld [vmem:[%s2 + $0x10] sm:$0xff]
          %v347 = vld [vmem:[%s2 + $0x18] sm:$0xff]
          %v348 = vld [vmem:[%s2 + $0x20] sm:$0xff]
          %v349 = vld [vmem:[%s2 + $0x28] sm:$0xff]
          %v350 = vld [vmem:[%s2 + $0x30] sm:$0xff]
          %v351 = vld [vmem:[%s2 + $0x38] sm:$0xff]
          %v352 = vld [vmem:[%s2 + $0x40] sm:$0xff]
          %v353 = vld [vmem:[%s2 + $0x48] sm:$0xff]
          %v354 = vld [vmem:[%s2 + $0x50] sm:$0xff]
          %v355 = vld [vmem:[%s2 + $0x58] sm:$0xff]
          %v356 = vld [vmem:[%s2 + $0x60] sm:$0xff]
          %v357 = vld [vmem:[%s2 + $0x68] sm:$0xff]
          %v358 = vld [vmem:[%s2 + $0x70] sm:$0xff]
          %v359 = vld [vmem:[%s2 + $0x78] sm:$0xff]
          %s360 = smul.u32 %s24, 128
          %s361 = sld [smem:[#allocation5 + %s360]]
          %v362 = vstv %s361
          %v363 = vmul.f32 %v344, %v362
          %v364 = vmul.f32 %v345, %v362
          %v365 = vmul.f32 %v346, %v362
          %v366 = vmul.f32 %v347, %v362
          %v367 = vmul.f32 %v348, %v362
          %v368 = vmul.f32 %v349, %v362
          %v369 = vmul.f32 %v350, %v362
          %v370 = vmul.f32 %v351, %v362
          %v371 = vmul.f32 %v352, %v362
          %v372 = vmul.f32 %v353, %v362
          %v373 = vmul.f32 %v354, %v362
          %v374 = vmul.f32 %v355, %v362
          %v375 = vmul.f32 %v356, %v362
          %v376 = vmul.f32 %v357, %v362
          %v377 = vmul.f32 %v358, %v362
          %v378 = vmul.f32 %v359, %v362
          %s379 = sadd.s32 %s360, 1
          %s380 = sld [smem:[#allocation5 + %s379]]
          %v381 = vstv %s380
          %v382 = vmul.f32 %v344, %v381
          %v383 = vmul.f32 %v345, %v381
          %v384 = vmul.f32 %v346, %v381
          %v385 = vmul.f32 %v347, %v381
          %v386 = vmul.f32 %v348, %v381
          %v387 = vmul.f32 %v349, %v381
          %v388 = vmul.f32 %v350, %v381
          %v389 = vmul.f32 %v351, %v381
          %v390 = vmul.f32 %v352, %v381
          %v391 = vmul.f32 %v353, %v381
          %v392 = vmul.f32 %v354, %v381
          %v393 = vmul.f32 %v355, %v381
          %v394 = vmul.f32 %v356, %v381
          %v395 = vmul.f32 %v357, %v381
          %v396 = vmul.f32 %v358, %v381
          %v397 = vmul.f32 %v359, %v381
          %414 = vrot.lane.b32.xlu0 %v382, 127
          %v415 = vpop.permute.xlu0 %414
          %416 = vrot.lane.b32.xlu0 %v383, 127
          %v417 = vpop.permute.xlu0 %416
          %418 = vrot.lane.b32.xlu0 %v384, 127
          %v419 = vpop.permute.xlu0 %418
          %420 = vrot.lane.b32.xlu0 %v385, 127
          %v421 = vpop.permute.xlu0 %420
          %422 = vrot.lane.b32.xlu0 %v386, 127
          %v423 = vpop.permute.xlu0 %422
          %424 = vrot.lane.b32.xlu0 %v387, 127
          %v425 = vpop.permute.xlu0 %424
          %426 = vrot.lane.b32.xlu0 %v388, 127
          %v427 = vpop.permute.xlu0 %426
          %428 = vrot.lane.b32.xlu0 %v389, 127
          %v429 = vpop.permute.xlu0 %428
          %430 = vrot.lane.b32.xlu0 %v390, 127
          %v431 = vpop.permute.xlu0 %430
          %432 = vrot.lane.b32.xlu0 %v391, 127
          %v433 = vpop.permute.xlu0 %432
          %434 = vrot.lane.b32.xlu0 %v392, 127
          %v435 = vpop.permute.xlu0 %434
          %436 = vrot.lane.b32.xlu0 %v393, 127
          %v437 = vpop.permute.xlu0 %436
          %438 = vrot.lane.b32.xlu0 %v394, 127
          %v439 = vpop.permute.xlu0 %438
          %440 = vrot.lane.b32.xlu0 %v395, 127
          %v441 = vpop.permute.xlu0 %440
          %442 = vrot.lane.b32.xlu0 %v396, 127
          %v443 = vpop.permute.xlu0 %442
          %444 = vrot.lane.b32.xlu0 %v397, 127
          %v445 = vpop.permute.xlu0 %444
          %v462 = vadd.f32 %v363, %v415
          %v463 = vadd.f32 %v364, %v417
          %v464 = vadd.f32 %v365, %v419
          %v465 = vadd.f32 %v366, %v421
          %v466 = vadd.f32 %v367, %v423
          %v467 = vadd.f32 %v368, %v425
          %v468 = vadd.f32 %v369, %v427
          %v469 = vadd.f32 %v370, %v429
          %v470 = vadd.f32 %v371, %v431
          %v471 = vadd.f32 %v372, %v433
          %v472 = vadd.f32 %v373, %v435
          %v473 = vadd.f32 %v374, %v437
          %v474 = vadd.f32 %v375, %v439
          %v475 = vadd.f32 %v376, %v441
          %v476 = vadd.f32 %v377, %v443
          %v477 = vadd.f32 %v378, %v445
          %s478 = sadd.s32 %s360, 2
          %s479 = sld [smem:[#allocation5 + %s478]]
          %v480 = vstv %s479
          %v481 = vmul.f32 %v344, %v480
          %v482 = vmul.f32 %v345, %v480
          %v483 = vmul.f32 %v346, %v480
          %v484 = vmul.f32 %v347, %v480
          %v485 = vmul.f32 %v348, %v480
          %v486 = vmul.f32 %v349, %v480
          %v487 = vmul.f32 %v350, %v480
          %v488 = vmul.f32 %v351, %v480
          %v489 = vmul.f32 %v352, %v480
          %v490 = vmul.f32 %v353, %v480
          %v491 = vmul.f32 %v354, %v480
          %v492 = vmul.f32 %v355, %v480
          %v493 = vmul.f32 %v356, %v480
          %v494 = vmul.f32 %v357, %v480
          %v495 = vmul.f32 %v358, %v480
          %v496 = vmul.f32 %v359, %v480
          %513 = vrot.lane.b32.xlu0 %v481, 126
          %v514 = vpop.permute.xlu0 %513
          %515 = vrot.lane.b32.xlu0 %v482, 126
          %v516 = vpop.permute.xlu0 %515
          %517 = vrot.lane.b32.xlu0 %v483, 126
          %v518 = vpop.permute.xlu0 %517
          %519 = vrot.lane.b32.xlu0 %v484, 126
          %v520 = vpop.permute.xlu0 %519
          %521 = vrot.lane.b32.xlu0 %v485, 126
          %v522 = vpop.permute.xlu0 %521
          %523 = vrot.lane.b32.xlu0 %v486, 126
          %v524 = vpop.permute.xlu0 %523
          %525 = vrot.lane.b32.xlu0 %v487, 126
          %v526 = vpop.permute.xlu0 %525
          %527 = vrot.lane.b32.xlu0 %v488, 126
          %v528 = vpop.permute.xlu0 %527
          %529 = vrot.lane.b32.xlu0 %v489, 126
          %v530 = vpop.permute.xlu0 %529
          %531 = vrot.lane.b32.xlu0 %v490, 126
          %v532 = vpop.permute.xlu0 %531
          %533 = vrot.lane.b32.xlu0 %v491, 126
          %v534 = vpop.permute.xlu0 %533
          %535 = vrot.lane.b32.xlu0 %v492, 126
          %v536 = vpop.permute.xlu0 %535
          %537 = vrot.lane.b32.xlu0 %v493, 126
          %v538 = vpop.permute.xlu0 %537
          %539 = vrot.lane.b32.xlu0 %v494, 126
          %v540 = vpop.permute.xlu0 %539
          %541 = vrot.lane.b32.xlu0 %v495, 126
          %v542 = vpop.permute.xlu0 %541
          %543 = vrot.lane.b32.xlu0 %v496, 126
          %v544 = vpop.permute.xlu0 %543
          %v561 = vadd.f32 %v462, %v514
          %v562 = vadd.f32 %v463, %v516
          %v563 = vadd.f32 %v464, %v518
          %v564 = vadd.f32 %v465, %v520
          %v565 = vadd.f32 %v466, %v522
          %v566 = vadd.f32 %v467, %v524
          %v567 = vadd.f32 %v468, %v526
          %v568 = vadd.f32 %v469, %v528
          %v569 = vadd.f32 %v470, %v530
          %v570 = vadd.f32 %v471, %v532
          %v571 = vadd.f32 %v472, %v534
          %v572 = vadd.f32 %v473, %v536
          %v573 = vadd.f32 %v474, %v538
          %v574 = vadd.f32 %v475, %v540
          %v575 = vadd.f32 %v476, %v542
          %v576 = vadd.f32 %v477, %v544
          %vm577 = vcmask 7168
          %578 = vst.msk [vmem:[#allocation3] sm:$0xff] %vm577, %v561
          %579 = vst.msk [vmem:[#allocation3 + $0x8] sm:$0xff] %vm577, %v562
          %580 = vst.msk [vmem:[#allocation3 + $0x10] sm:$0xff] %vm577, %v563
          %581 = vst.msk [vmem:[#allocation3 + $0x18] sm:$0xff] %vm577, %v564
          %582 = vst.msk [vmem:[#allocation3 + $0x20] sm:$0xff] %vm577, %v565
          %583 = vst.msk [vmem:[#allocation3 + $0x28] sm:$0xff] %vm577, %v566
          %584 = vst.msk [vmem:[#allocation3 + $0x30] sm:$0xff] %vm577, %v567
          %585 = vst.msk [vmem:[#allocation3 + $0x38] sm:$0xff] %vm577, %v568
          %586 = vst.msk [vmem:[#allocation3 + $0x40] sm:$0xff] %vm577, %v569
          %587 = vst.msk [vmem:[#allocation3 + $0x48] sm:$0xff] %vm577, %v570
          %588 = vst.msk [vmem:[#allocation3 + $0x50] sm:$0xff] %vm577, %v571
          %589 = vst.msk [vmem:[#allocation3 + $0x58] sm:$0xff] %vm577, %v572
          %590 = vst.msk [vmem:[#allocation3 + $0x60] sm:$0xff] %vm577, %v573
          %591 = vst.msk [vmem:[#allocation3 + $0x68] sm:$0xff] %vm577, %v574
          %592 = vst.msk [vmem:[#allocation3 + $0x70] sm:$0xff] %vm577, %v575
          %593 = vst.msk [vmem:[#allocation3 + $0x78] sm:$0xff] %vm577, %v576
        $region56: #{tpu_custom_call.1} parent=47 // pred_fallthru
          _
        %v594 = vld [vmem:[%s2] sm:$0xff]
        %v595 = vld [vmem:[%s2 + $0x8] sm:$0xff]
        %v596 = vld [vmem:[%s2 + $0x10] sm:$0xff]
        %v597 = vld [vmem:[%s2 + $0x18] sm:$0xff]
        %v598 = vld [vmem:[%s2 + $0x20] sm:$0xff]
        %v599 = vld [vmem:[%s2 + $0x28] sm:$0xff]
        %v600 = vld [vmem:[%s2 + $0x30] sm:$0xff]
        %v601 = vld [vmem:[%s2 + $0x38] sm:$0xff]
        %v602 = vld [vmem:[%s2 + $0x40] sm:$0xff]
        %v603 = vld [vmem:[%s2 + $0x48] sm:$0xff]
        %v604 = vld [vmem:[%s2 + $0x50] sm:$0xff]
        %v605 = vld [vmem:[%s2 + $0x58] sm:$0xff]
        %v606 = vld [vmem:[%s2 + $0x60] sm:$0xff]
        %v607 = vld [vmem:[%s2 + $0x68] sm:$0xff]
        %v608 = vld [vmem:[%s2 + $0x70] sm:$0xff]
        %v609 = vld [vmem:[%s2 + $0x78] sm:$0xff]
        %v610 = vld [vmem:[%s327] sm:$0x1]
        %612 = vset.pattern.permute.xlu0 0
        %613 = vperm.xlu0 %612, %v594
        %v614 = vpop.permute.xlu0 %613
        %617 = vset.pattern.permute.xlu0 0
        %618 = vperm.xlu0 %617, %v595
        %v619 = vpop.permute.xlu0 %618
        %622 = vset.pattern.permute.xlu0 0
        %623 = vperm.xlu0 %622, %v596
        %v624 = vpop.permute.xlu0 %623
        %627 = vset.pattern.permute.xlu0 0
        %628 = vperm.xlu0 %627, %v597
        %v629 = vpop.permute.xlu0 %628
        %632 = vset.pattern.permute.xlu0 0
        %633 = vperm.xlu0 %632, %v598
        %v634 = vpop.permute.xlu0 %633
        %637 = vset.pattern.permute.xlu0 0
        %638 = vperm.xlu0 %637, %v599
        %v639 = vpop.permute.xlu0 %638
        %642 = vset.pattern.permute.xlu0 0
        %643 = vperm.xlu0 %642, %v600
        %v644 = vpop.permute.xlu0 %643
        %647 = vset.pattern.permute.xlu0 0
        %648 = vperm.xlu0 %647, %v601
        %v649 = vpop.permute.xlu0 %648
        %652 = vset.pattern.permute.xlu0 0
        %653 = vperm.xlu0 %652, %v602
        %v654 = vpop.permute.xlu0 %653
        %657 = vset.pattern.permute.xlu0 0
        %658 = vperm.xlu0 %657, %v603
        %v659 = vpop.permute.xlu0 %658
        %662 = vset.pattern.permute.xlu0 0
        %663 = vperm.xlu0 %662, %v604
        %v664 = vpop.permute.xlu0 %663
        %667 = vset.pattern.permute.xlu0 0
        %668 = vperm.xlu0 %667, %v605
        %v669 = vpop.permute.xlu0 %668
        %672 = vset.pattern.permute.xlu0 0
        %673 = vperm.xlu0 %672, %v606
        %v674 = vpop.permute.xlu0 %673
        %677 = vset.pattern.permute.xlu0 0
        %678 = vperm.xlu0 %677, %v607
        %v679 = vpop.permute.xlu0 %678
        %682 = vset.pattern.permute.xlu0 0
        %683 = vperm.xlu0 %682, %v608
        %v684 = vpop.permute.xlu0 %683
        %687 = vset.pattern.permute.xlu0 0
        %688 = vperm.xlu0 %687, %v609
        %v689 = vpop.permute.xlu0 %688
        %v691 = vlaneseq
        %v692 = vshrl.u32 %v691, 7
        %v693 = vsub.s32 0, %v692
        %v694 = vrot.slane %v610, %v693
        %v695 = vmul.f32 %v614, %v694
        %v696 = vmul.f32 %v619, %v694
        %v697 = vmul.f32 %v624, %v694
        %v698 = vmul.f32 %v629, %v694
        %v699 = vmul.f32 %v634, %v694
        %v700 = vmul.f32 %v639, %v694
        %v701 = vmul.f32 %v644, %v694
        %v702 = vmul.f32 %v649, %v694
        %v703 = vmul.f32 %v654, %v694
        %v704 = vmul.f32 %v659, %v694
        %v705 = vmul.f32 %v664, %v694
        %v706 = vmul.f32 %v669, %v694
        %v707 = vmul.f32 %v674, %v694
        %v708 = vmul.f32 %v679, %v694
        %v709 = vmul.f32 %v684, %v694
        %v710 = vmul.f32 %v689, %v694
        %v711 = vld [vmem:[%s327 + $0x1] sm:$0x1]
        %712 = vset.pattern.permute.xlu0 1
        %713 = vperm.xlu0 %712, %v594
        %v714 = vpop.permute.xlu0 %713
        %716 = vset.pattern.permute.xlu0 1
        %717 = vperm.xlu0 %716, %v595
        %v718 = vpop.permute.xlu0 %717
        %720 = vset.pattern.permute.xlu0 1
        %721 = vperm.xlu0 %720, %v596
        %v722 = vpop.permute.xlu0 %721
        %724 = vset.pattern.permute.xlu0 1
        %725 = vperm.xlu0 %724, %v597
        %v726 = vpop.permute.xlu0 %725
        %728 = vset.pattern.permute.xlu0 1
        %729 = vperm.xlu0 %728, %v598
        %v730 = vpop.permute.xlu0 %729
        %732 = vset.pattern.permute.xlu0 1
        %733 = vperm.xlu0 %732, %v599
        %v734 = vpop.permute.xlu0 %733
        %736 = vset.pattern.permute.xlu0 1
        %737 = vperm.xlu0 %736, %v600
        %v738 = vpop.permute.xlu0 %737
        %740 = vset.pattern.permute.xlu0 1
        %741 = vperm.xlu0 %740, %v601
        %v742 = vpop.permute.xlu0 %741
        %744 = vset.pattern.permute.xlu0 1
        %745 = vperm.xlu0 %744, %v602
        %v746 = vpop.permute.xlu0 %745
        %748 = vset.pattern.permute.xlu0 1
        %749 = vperm.xlu0 %748, %v603
        %v750 = vpop.permute.xlu0 %749
        %752 = vset.pattern.permute.xlu0 1
        %753 = vperm.xlu0 %752, %v604
        %v754 = vpop.permute.xlu0 %753
        %756 = vset.pattern.permute.xlu0 1
        %757 = vperm.xlu0 %756, %v605
        %v758 = vpop.permute.xlu0 %757
        %760 = vset.pattern.permute.xlu0 1
        %761 = vperm.xlu0 %760, %v606
        %v762 = vpop.permute.xlu0 %761
        %764 = vset.pattern.permute.xlu0 1
        %765 = vperm.xlu0 %764, %v607
        %v766 = vpop.permute.xlu0 %765
        %768 = vset.pattern.permute.xlu0 1
        %769 = vperm.xlu0 %768, %v608
        %v770 = vpop.permute.xlu0 %769
        %772 = vset.pattern.permute.xlu0 1
        %773 = vperm.xlu0 %772, %v609
        %v774 = vpop.permute.xlu0 %773
        %v776 = vlaneseq
        %v777 = vshrl.u32 %v776, 7
        %v778 = vsub.s32 0, %v777
        %v779 = vrot.slane %v711, %v778
        %v780 = vmul.f32 %v714, %v779
        %v781 = vmul.f32 %v718, %v779
        %v782 = vmul.f32 %v722, %v779
        %v783 = vmul.f32 %v726, %v779
        %v784 = vmul.f32 %v730, %v779
        %v785 = vmul.f32 %v734, %v779
        %v786 = vmul.f32 %v738, %v779
        %v787 = vmul.f32 %v742, %v779
        %v788 = vmul.f32 %v746, %v779
        %v789 = vmul.f32 %v750, %v779
        %v790 = vmul.f32 %v754, %v779
        %v791 = vmul.f32 %v758, %v779
        %v792 = vmul.f32 %v762, %v779
        %v793 = vmul.f32 %v766, %v779
        %v794 = vmul.f32 %v770, %v779
        %v795 = vmul.f32 %v774, %v779
        %v796 = vadd.f32 %v695, %v780
        %v797 = vadd.f32 %v696, %v781
        %v798 = vadd.f32 %v697, %v782
        %v799 = vadd.f32 %v698, %v783
        %v800 = vadd.f32 %v699, %v784
        %v801 = vadd.f32 %v700, %v785
        %v802 = vadd.f32 %v701, %v786
        %v803 = vadd.f32 %v702, %v787
        %v804 = vadd.f32 %v703, %v788
        %v805 = vadd.f32 %v704, %v789
        %v806 = vadd.f32 %v705, %v790
        %v807 = vadd.f32 %v706, %v791
        %v808 = vadd.f32 %v707, %v792
        %v809 = vadd.f32 %v708, %v793
        %v810 = vadd.f32 %v709, %v794
        %v811 = vadd.f32 %v710, %v795
        %v812 = vld [vmem:[%s327 + $0x2] sm:$0x1]
        %813 = vset.pattern.permute.xlu0 2
        %814 = vperm.xlu0 %813, %v594
        %v815 = vpop.permute.xlu0 %814
        %817 = vset.pattern.permute.xlu0 2
        %818 = vperm.xlu0 %817, %v595
        %v819 = vpop.permute.xlu0 %818
        %821 = vset.pattern.permute.xlu0 2
        %822 = vperm.xlu0 %821, %v596
        %v823 = vpop.permute.xlu0 %822
        %825 = vset.pattern.permute.xlu0 2
        %826 = vperm.xlu0 %825, %v597
        %v827 = vpop.permute.xlu0 %826
        %829 = vset.pattern.permute.xlu0 2
        %830 = vperm.xlu0 %829, %v598
        %v831 = vpop.permute.xlu0 %830
        %833 = vset.pattern.permute.xlu0 2
        %834 = vperm.xlu0 %833, %v599
        %v835 = vpop.permute.xlu0 %834
        %837 = vset.pattern.permute.xlu0 2
        %838 = vperm.xlu0 %837, %v600
        %v839 = vpop.permute.xlu0 %838
        %841 = vset.pattern.permute.xlu0 2
        %842 = vperm.xlu0 %841, %v601
        %v843 = vpop.permute.xlu0 %842
        %845 = vset.pattern.permute.xlu0 2
        %846 = vperm.xlu0 %845, %v602
        %v847 = vpop.permute.xlu0 %846
        %849 = vset.pattern.permute.xlu0 2
        %850 = vperm.xlu0 %849, %v603
        %v851 = vpop.permute.xlu0 %850
        %853 = vset.pattern.permute.xlu0 2
        %854 = vperm.xlu0 %853, %v604
        %v855 = vpop.permute.xlu0 %854
        %857 = vset.pattern.permute.xlu0 2
        %858 = vperm.xlu0 %857, %v605
        %v859 = vpop.permute.xlu0 %858
        %861 = vset.pattern.permute.xlu0 2
        %862 = vperm.xlu0 %861, %v606
        %v863 = vpop.permute.xlu0 %862
        %865 = vset.pattern.permute.xlu0 2
        %866 = vperm.xlu0 %865, %v607
        %v867 = vpop.permute.xlu0 %866
        %869 = vset.pattern.permute.xlu0 2
        %870 = vperm.xlu0 %869, %v608
        %v871 = vpop.permute.xlu0 %870
        %873 = vset.pattern.permute.xlu0 2
        %874 = vperm.xlu0 %873, %v609
        %v875 = vpop.permute.xlu0 %874
        %v877 = vlaneseq
        %v878 = vshrl.u32 %v877, 7
        %v879 = vsub.s32 0, %v878
        %v880 = vrot.slane %v812, %v879
        %v881 = vmul.f32 %v815, %v880
        %v882 = vmul.f32 %v819, %v880
        %v883 = vmul.f32 %v823, %v880
        %v884 = vmul.f32 %v827, %v880
        %v885 = vmul.f32 %v831, %v880
        %v886 = vmul.f32 %v835, %v880
        %v887 = vmul.f32 %v839, %v880
        %v888 = vmul.f32 %v843, %v880
        %v889 = vmul.f32 %v847, %v880
        %v890 = vmul.f32 %v851, %v880
        %v891 = vmul.f32 %v855, %v880
        %v892 = vmul.f32 %v859, %v880
        %v893 = vmul.f32 %v863, %v880
        %v894 = vmul.f32 %v867, %v880
        %v895 = vmul.f32 %v871, %v880
        %v896 = vmul.f32 %v875, %v880
        %v897 = vadd.f32 %v796, %v881
        %v898 = vadd.f32 %v797, %v882
        %v899 = vadd.f32 %v798, %v883
        %v900 = vadd.f32 %v799, %v884
        %v901 = vadd.f32 %v800, %v885
        %v902 = vadd.f32 %v801, %v886
        %v903 = vadd.f32 %v802, %v887
        %v904 = vadd.f32 %v803, %v888
        %v905 = vadd.f32 %v804, %v889
        %v906 = vadd.f32 %v805, %v890
        %v907 = vadd.f32 %v806, %v891
        %v908 = vadd.f32 %v807, %v892
        %v909 = vadd.f32 %v808, %v893
        %v910 = vadd.f32 %v809, %v894
        %v911 = vadd.f32 %v810, %v895
        %v912 = vadd.f32 %v811, %v896
        %v913 = vld [vmem:[%s3] sm:$0xff]
        %v914 = vld [vmem:[%s3 + $0x8] sm:$0xff]
        %v915 = vld [vmem:[%s3 + $0x10] sm:$0xff]
        %v916 = vld [vmem:[%s3 + $0x18] sm:$0xff]
        %v917 = vld [vmem:[%s3 + $0x20] sm:$0xff]
        %v918 = vld [vmem:[%s3 + $0x28] sm:$0xff]
        %v919 = vld [vmem:[%s3 + $0x30] sm:$0xff]
        %v920 = vld [vmem:[%s3 + $0x38] sm:$0xff]
        %v921 = vld [vmem:[%s3 + $0x40] sm:$0xff]
        %v922 = vld [vmem:[%s3 + $0x48] sm:$0xff]
        %v923 = vld [vmem:[%s3 + $0x50] sm:$0xff]
        %v924 = vld [vmem:[%s3 + $0x58] sm:$0xff]
        %v925 = vld [vmem:[%s3 + $0x60] sm:$0xff]
        %v926 = vld [vmem:[%s3 + $0x68] sm:$0xff]
        %v927 = vld [vmem:[%s3 + $0x70] sm:$0xff]
        %v928 = vld [vmem:[%s3 + $0x78] sm:$0xff]
        %v929 = vld [vmem:[%s335] sm:$0x1]
        %931 = vset.pattern.permute.xlu0 0
        %932 = vperm.xlu0 %931, %v913
        %v933 = vpop.permute.xlu0 %932
        %936 = vset.pattern.permute.xlu0 0
        %937 = vperm.xlu0 %936, %v914
        %v938 = vpop.permute.xlu0 %937
        %941 = vset.pattern.permute.xlu0 0
        %942 = vperm.xlu0 %941, %v915
        %v943 = vpop.permute.xlu0 %942
        %946 = vset.pattern.permute.xlu0 0
        %947 = vperm.xlu0 %946, %v916
        %v948 = vpop.permute.xlu0 %947
        %951 = vset.pattern.permute.xlu0 0
        %952 = vperm.xlu0 %951, %v917
        %v953 = vpop.permute.xlu0 %952
        %956 = vset.pattern.permute.xlu0 0
        %957 = vperm.xlu0 %956, %v918
        %v958 = vpop.permute.xlu0 %957
        %961 = vset.pattern.permute.xlu0 0
        %962 = vperm.xlu0 %961, %v919
        %v963 = vpop.permute.xlu0 %962
        %966 = vset.pattern.permute.xlu0 0
        %967 = vperm.xlu0 %966, %v920
        %v968 = vpop.permute.xlu0 %967
        %971 = vset.pattern.permute.xlu0 0
        %972 = vperm.xlu0 %971, %v921
        %v973 = vpop.permute.xlu0 %972
        %976 = vset.pattern.permute.xlu0 0
        %977 = vperm.xlu0 %976, %v922
        %v978 = vpop.permute.xlu0 %977
        %981 = vset.pattern.permute.xlu0 0
        %982 = vperm.xlu0 %981, %v923
        %v983 = vpop.permute.xlu0 %982
        %986 = vset.pattern.permute.xlu0 0
        %987 = vperm.xlu0 %986, %v924
        %v988 = vpop.permute.xlu0 %987
        %991 = vset.pattern.permute.xlu0 0
        %992 = vperm.xlu0 %991, %v925
        %v993 = vpop.permute.xlu0 %992
        %996 = vset.pattern.permute.xlu0 0
        %997 = vperm.xlu0 %996, %v926
        %v998 = vpop.permute.xlu0 %997
        %1001 = vset.pattern.permute.xlu0 0
        %1002 = vperm.xlu0 %1001, %v927
        %v1003 = vpop.permute.xlu0 %1002
        %1006 = vset.pattern.permute.xlu0 0
        %1007 = vperm.xlu0 %1006, %v928
        %v1008 = vpop.permute.xlu0 %1007
        %v1010 = vlaneseq
        %v1011 = vshrl.u32 %v1010, 7
        %v1012 = vsub.s32 0, %v1011
        %v1013 = vrot.slane %v929, %v1012
        %v1014 = vmul.f32 %v933, %v1013
        %v1015 = vmul.f32 %v938, %v1013
        %v1016 = vmul.f32 %v943, %v1013
        %v1017 = vmul.f32 %v948, %v1013
        %v1018 = vmul.f32 %v953, %v1013
        %v1019 = vmul.f32 %v958, %v1013
        %v1020 = vmul.f32 %v963, %v1013
        %v1021 = vmul.f32 %v968, %v1013
        %v1022 = vmul.f32 %v973, %v1013
        %v1023 = vmul.f32 %v978, %v1013
        %v1024 = vmul.f32 %v983, %v1013
        %v1025 = vmul.f32 %v988, %v1013
        %v1026 = vmul.f32 %v993, %v1013
        %v1027 = vmul.f32 %v998, %v1013
        %v1028 = vmul.f32 %v1003, %v1013
        %v1029 = vmul.f32 %v1008, %v1013
        %v1030 = vld [vmem:[%s335 + $0x1] sm:$0x1]
        %1031 = vset.pattern.permute.xlu0 1
        %1032 = vperm.xlu0 %1031, %v913
        %v1033 = vpop.permute.xlu0 %1032
        %1035 = vset.pattern.permute.xlu0 1
        %1036 = vperm.xlu0 %1035, %v914
        %v1037 = vpop.permute.xlu0 %1036
        %1039 = vset.pattern.permute.xlu0 1
        %1040 = vperm.xlu0 %1039, %v915
        %v1041 = vpop.permute.xlu0 %1040
        %1043 = vset.pattern.permute.xlu0 1
        %1044 = vperm.xlu0 %1043, %v916
        %v1045 = vpop.permute.xlu0 %1044
        %1047 = vset.pattern.permute.xlu0 1
        %1048 = vperm.xlu0 %1047, %v917
        %v1049 = vpop.permute.xlu0 %1048
        %1051 = vset.pattern.permute.xlu0 1
        %1052 = vperm.xlu0 %1051, %v918
        %v1053 = vpop.permute.xlu0 %1052
        %1055 = vset.pattern.permute.xlu0 1
        %1056 = vperm.xlu0 %1055, %v919
        %v1057 = vpop.permute.xlu0 %1056
        %1059 = vset.pattern.permute.xlu0 1
        %1060 = vperm.xlu0 %1059, %v920
        %v1061 = vpop.permute.xlu0 %1060
        %1063 = vset.pattern.permute.xlu0 1
        %1064 = vperm.xlu0 %1063, %v921
        %v1065 = vpop.permute.xlu0 %1064
        %1067 = vset.pattern.permute.xlu0 1
        %1068 = vperm.xlu0 %1067, %v922
        %v1069 = vpop.permute.xlu0 %1068
        %1071 = vset.pattern.permute.xlu0 1
        %1072 = vperm.xlu0 %1071, %v923
        %v1073 = vpop.permute.xlu0 %1072
        %1075 = vset.pattern.permute.xlu0 1
        %1076 = vperm.xlu0 %1075, %v924
        %v1077 = vpop.permute.xlu0 %1076
        %1079 = vset.pattern.permute.xlu0 1
        %1080 = vperm.xlu0 %1079, %v925
        %v1081 = vpop.permute.xlu0 %1080
        %1083 = vset.pattern.permute.xlu0 1
        %1084 = vperm.xlu0 %1083, %v926
        %v1085 = vpop.permute.xlu0 %1084
        %1087 = vset.pattern.permute.xlu0 1
        %1088 = vperm.xlu0 %1087, %v927
        %v1089 = vpop.permute.xlu0 %1088
        %1091 = vset.pattern.permute.xlu0 1
        %1092 = vperm.xlu0 %1091, %v928
        %v1093 = vpop.permute.xlu0 %1092
        %v1095 = vlaneseq
        %v1096 = vshrl.u32 %v1095, 7
        %v1097 = vsub.s32 0, %v1096
        %v1098 = vrot.slane %v1030, %v1097
        %v1099 = vmul.f32 %v1033, %v1098
        %v1100 = vmul.f32 %v1037, %v1098
        %v1101 = vmul.f32 %v1041, %v1098
        %v1102 = vmul.f32 %v1045, %v1098
        %v1103 = vmul.f32 %v1049, %v1098
        %v1104 = vmul.f32 %v1053, %v1098
        %v1105 = vmul.f32 %v1057, %v1098
        %v1106 = vmul.f32 %v1061, %v1098
        %v1107 = vmul.f32 %v1065, %v1098
        %v1108 = vmul.f32 %v1069, %v1098
        %v1109 = vmul.f32 %v1073, %v1098
        %v1110 = vmul.f32 %v1077, %v1098
        %v1111 = vmul.f32 %v1081, %v1098
        %v1112 = vmul.f32 %v1085, %v1098
        %v1113 = vmul.f32 %v1089, %v1098
        %v1114 = vmul.f32 %v1093, %v1098
        %v1115 = vadd.f32 %v1014, %v1099
        %v1116 = vadd.f32 %v1015, %v1100
        %v1117 = vadd.f32 %v1016, %v1101
        %v1118 = vadd.f32 %v1017, %v1102
        %v1119 = vadd.f32 %v1018, %v1103
        %v1120 = vadd.f32 %v1019, %v1104
        %v1121 = vadd.f32 %v1020, %v1105
        %v1122 = vadd.f32 %v1021, %v1106
        %v1123 = vadd.f32 %v1022, %v1107
        %v1124 = vadd.f32 %v1023, %v1108
        %v1125 = vadd.f32 %v1024, %v1109
        %v1126 = vadd.f32 %v1025, %v1110
        %v1127 = vadd.f32 %v1026, %v1111
        %v1128 = vadd.f32 %v1027, %v1112
        %v1129 = vadd.f32 %v1028, %v1113
        %v1130 = vadd.f32 %v1029, %v1114
        %v1131 = vld [vmem:[%s335 + $0x2] sm:$0x1]
        %1132 = vset.pattern.permute.xlu0 2
        %1133 = vperm.xlu0 %1132, %v913
        %v1134 = vpop.permute.xlu0 %1133
        %1136 = vset.pattern.permute.xlu0 2
        %1137 = vperm.xlu0 %1136, %v914
        %v1138 = vpop.permute.xlu0 %1137
        %1140 = vset.pattern.permute.xlu0 2
        %1141 = vperm.xlu0 %1140, %v915
        %v1142 = vpop.permute.xlu0 %1141
        %1144 = vset.pattern.permute.xlu0 2
        %1145 = vperm.xlu0 %1144, %v916
        %v1146 = vpop.permute.xlu0 %1145
        %1148 = vset.pattern.permute.xlu0 2
        %1149 = vperm.xlu0 %1148, %v917
        %v1150 = vpop.permute.xlu0 %1149
        %1152 = vset.pattern.permute.xlu0 2
        %1153 = vperm.xlu0 %1152, %v918
        %v1154 = vpop.permute.xlu0 %1153
        %1156 = vset.pattern.permute.xlu0 2
        %1157 = vperm.xlu0 %1156, %v919
        %v1158 = vpop.permute.xlu0 %1157
        %1160 = vset.pattern.permute.xlu0 2
        %1161 = vperm.xlu0 %1160, %v920
        %v1162 = vpop.permute.xlu0 %1161
        %1164 = vset.pattern.permute.xlu0 2
        %1165 = vperm.xlu0 %1164, %v921
        %v1166 = vpop.permute.xlu0 %1165
        %1168 = vset.pattern.permute.xlu0 2
        %1169 = vperm.xlu0 %1168, %v922
        %v1170 = vpop.permute.xlu0 %1169
        %1172 = vset.pattern.permute.xlu0 2
        %1173 = vperm.xlu0 %1172, %v923
        %v1174 = vpop.permute.xlu0 %1173
        %1176 = vset.pattern.permute.xlu0 2
        %1177 = vperm.xlu0 %1176, %v924
        %v1178 = vpop.permute.xlu0 %1177
        %1180 = vset.pattern.permute.xlu0 2
        %1181 = vperm.xlu0 %1180, %v925
        %v1182 = vpop.permute.xlu0 %1181
        %1184 = vset.pattern.permute.xlu0 2
        %1185 = vperm.xlu0 %1184, %v926
        %v1186 = vpop.permute.xlu0 %1185
        %1188 = vset.pattern.permute.xlu0 2
        %1189 = vperm.xlu0 %1188, %v927
        %v1190 = vpop.permute.xlu0 %1189
        %1192 = vset.pattern.permute.xlu0 2
        %1193 = vperm.xlu0 %1192, %v928
        %v1194 = vpop.permute.xlu0 %1193
        %v1196 = vlaneseq
        %v1197 = vshrl.u32 %v1196, 7
        %v1198 = vsub.s32 0, %v1197
        %v1199 = vrot.slane %v1131, %v1198
        %v1200 = vmul.f32 %v1134, %v1199
        %v1201 = vmul.f32 %v1138, %v1199
        %v1202 = vmul.f32 %v1142, %v1199
        %v1203 = vmul.f32 %v1146, %v1199
        %v1204 = vmul.f32 %v1150, %v1199
        %v1205 = vmul.f32 %v1154, %v1199
        %v1206 = vmul.f32 %v1158, %v1199
        %v1207 = vmul.f32 %v1162, %v1199
        %v1208 = vmul.f32 %v1166, %v1199
        %v1209 = vmul.f32 %v1170, %v1199
        %v1210 = vmul.f32 %v1174, %v1199
        %v1211 = vmul.f32 %v1178, %v1199
        %v1212 = vmul.f32 %v1182, %v1199
        %v1213 = vmul.f32 %v1186, %v1199
        %v1214 = vmul.f32 %v1190, %v1199
        %v1215 = vmul.f32 %v1194, %v1199
        %v1216 = vadd.f32 %v1115, %v1200
        %v1217 = vadd.f32 %v1116, %v1201
        %v1218 = vadd.f32 %v1117, %v1202
        %v1219 = vadd.f32 %v1118, %v1203
        %v1220 = vadd.f32 %v1119, %v1204
        %v1221 = vadd.f32 %v1120, %v1205
        %v1222 = vadd.f32 %v1121, %v1206
        %v1223 = vadd.f32 %v1122, %v1207
        %v1224 = vadd.f32 %v1123, %v1208
        %v1225 = vadd.f32 %v1124, %v1209
        %v1226 = vadd.f32 %v1125, %v1210
        %v1227 = vadd.f32 %v1126, %v1211
        %v1228 = vadd.f32 %v1127, %v1212
        %v1229 = vadd.f32 %v1128, %v1213
        %v1230 = vadd.f32 %v1129, %v1214
        %v1231 = vadd.f32 %v1130, %v1215
        %v1232 = vld [vmem:[%s335 + $0x3] sm:$0x1]
        %1233 = vset.pattern.permute.xlu0 3
        %1234 = vperm.xlu0 %1233, %v913
        %v1235 = vpop.permute.xlu0 %1234
        %1237 = vset.pattern.permute.xlu0 3
        %1238 = vperm.xlu0 %1237, %v914
        %v1239 = vpop.permute.xlu0 %1238
        %1241 = vset.pattern.permute.xlu0 3
        %1242 = vperm.xlu0 %1241, %v915
        %v1243 = vpop.permute.xlu0 %1242
        %1245 = vset.pattern.permute.xlu0 3
        %1246 = vperm.xlu0 %1245, %v916
        %v1247 = vpop.permute.xlu0 %1246
        %1249 = vset.pattern.permute.xlu0 3
        %1250 = vperm.xlu0 %1249, %v917
        %v1251 = vpop.permute.xlu0 %1250
        %1253 = vset.pattern.permute.xlu0 3
        %1254 = vperm.xlu0 %1253, %v918
        %v1255 = vpop.permute.xlu0 %1254
        %1257 = vset.pattern.permute.xlu0 3
        %1258 = vperm.xlu0 %1257, %v919
        %v1259 = vpop.permute.xlu0 %1258
        %1261 = vset.pattern.permute.xlu0 3
        %1262 = vperm.xlu0 %1261, %v920
        %v1263 = vpop.permute.xlu0 %1262
        %1265 = vset.pattern.permute.xlu0 3
        %1266 = vperm.xlu0 %1265, %v921
        %v1267 = vpop.permute.xlu0 %1266
        %1269 = vset.pattern.permute.xlu0 3
        %1270 = vperm.xlu0 %1269, %v922
        %v1271 = vpop.permute.xlu0 %1270
        %1273 = vset.pattern.permute.xlu0 3
        %1274 = vperm.xlu0 %1273, %v923
        %v1275 = vpop.permute.xlu0 %1274
        %1277 = vset.pattern.permute.xlu0 3
        %1278 = vperm.xlu0 %1277, %v924
        %v1279 = vpop.permute.xlu0 %1278
        %1281 = vset.pattern.permute.xlu0 3
        %1282 = vperm.xlu0 %1281, %v925
        %v1283 = vpop.permute.xlu0 %1282
        %1285 = vset.pattern.permute.xlu0 3
        %1286 = vperm.xlu0 %1285, %v926
        %v1287 = vpop.permute.xlu0 %1286
        %1289 = vset.pattern.permute.xlu0 3
        %1290 = vperm.xlu0 %1289, %v927
        %v1291 = vpop.permute.xlu0 %1290
        %1293 = vset.pattern.permute.xlu0 3
        %1294 = vperm.xlu0 %1293, %v928
        %v1295 = vpop.permute.xlu0 %1294
        %v1297 = vlaneseq
        %v1298 = vshrl.u32 %v1297, 7
        %v1299 = vsub.s32 0, %v1298
        %v1300 = vrot.slane %v1232, %v1299
        %v1301 = vmul.f32 %v1235, %v1300
        %v1302 = vmul.f32 %v1239, %v1300
        %v1303 = vmul.f32 %v1243, %v1300
        %v1304 = vmul.f32 %v1247, %v1300
        %v1305 = vmul.f32 %v1251, %v1300
        %v1306 = vmul.f32 %v1255, %v1300
        %v1307 = vmul.f32 %v1259, %v1300
        %v1308 = vmul.f32 %v1263, %v1300
        %v1309 = vmul.f32 %v1267, %v1300
        %v1310 = vmul.f32 %v1271, %v1300
        %v1311 = vmul.f32 %v1275, %v1300
        %v1312 = vmul.f32 %v1279, %v1300
        %v1313 = vmul.f32 %v1283, %v1300
        %v1314 = vmul.f32 %v1287, %v1300
        %v1315 = vmul.f32 %v1291, %v1300
        %v1316 = vmul.f32 %v1295, %v1300
        %v1317 = vadd.f32 %v1216, %v1301
        %v1318 = vadd.f32 %v1217, %v1302
        %v1319 = vadd.f32 %v1218, %v1303
        %v1320 = vadd.f32 %v1219, %v1304
        %v1321 = vadd.f32 %v1220, %v1305
        %v1322 = vadd.f32 %v1221, %v1306
        %v1323 = vadd.f32 %v1222, %v1307
        %v1324 = vadd.f32 %v1223, %v1308
        %v1325 = vadd.f32 %v1224, %v1309
        %v1326 = vadd.f32 %v1225, %v1310
        %v1327 = vadd.f32 %v1226, %v1311
        %v1328 = vadd.f32 %v1227, %v1312
        %v1329 = vadd.f32 %v1228, %v1313
        %v1330 = vadd.f32 %v1229, %v1314
        %v1331 = vadd.f32 %v1230, %v1315
        %v1332 = vadd.f32 %v1231, %v1316
        %v1333 = vld [vmem:[%s335 + $0x4] sm:$0x1]
        %1334 = vset.pattern.permute.xlu0 4
        %1335 = vperm.xlu0 %1334, %v913
        %v1336 = vpop.permute.xlu0 %1335
        %1338 = vset.pattern.permute.xlu0 4
        %1339 = vperm.xlu0 %1338, %v914
        %v1340 = vpop.permute.xlu0 %1339
        %1342 = vset.pattern.permute.xlu0 4
        %1343 = vperm.xlu0 %1342, %v915
        %v1344 = vpop.permute.xlu0 %1343
        %1346 = vset.pattern.permute.xlu0 4
        %1347 = vperm.xlu0 %1346, %v916
        %v1348 = vpop.permute.xlu0 %1347
        %1350 = vset.pattern.permute.xlu0 4
        %1351 = vperm.xlu0 %1350, %v917
        %v1352 = vpop.permute.xlu0 %1351
        %1354 = vset.pattern.permute.xlu0 4
        %1355 = vperm.xlu0 %1354, %v918
        %v1356 = vpop.permute.xlu0 %1355
        %1358 = vset.pattern.permute.xlu0 4
        %1359 = vperm.xlu0 %1358, %v919
        %v1360 = vpop.permute.xlu0 %1359
        %1362 = vset.pattern.permute.xlu0 4
        %1363 = vperm.xlu0 %1362, %v920
        %v1364 = vpop.permute.xlu0 %1363
        %1366 = vset.pattern.permute.xlu0 4
        %1367 = vperm.xlu0 %1366, %v921
        %v1368 = vpop.permute.xlu0 %1367
        %1370 = vset.pattern.permute.xlu0 4
        %1371 = vperm.xlu0 %1370, %v922
        %v1372 = vpop.permute.xlu0 %1371
        %1374 = vset.pattern.permute.xlu0 4
        %1375 = vperm.xlu0 %1374, %v923
        %v1376 = vpop.permute.xlu0 %1375
        %1378 = vset.pattern.permute.xlu0 4
        %1379 = vperm.xlu0 %1378, %v924
        %v1380 = vpop.permute.xlu0 %1379
        %1382 = vset.pattern.permute.xlu0 4
        %1383 = vperm.xlu0 %1382, %v925
        %v1384 = vpop.permute.xlu0 %1383
        %1386 = vset.pattern.permute.xlu0 4
        %1387 = vperm.xlu0 %1386, %v926
        %v1388 = vpop.permute.xlu0 %1387
        %1390 = vset.pattern.permute.xlu0 4
        %1391 = vperm.xlu0 %1390, %v927
        %v1392 = vpop.permute.xlu0 %1391
        %1394 = vset.pattern.permute.xlu0 4
        %1395 = vperm.xlu0 %1394, %v928
        %v1396 = vpop.permute.xlu0 %1395
        %v1398 = vlaneseq
        %v1399 = vshrl.u32 %v1398, 7
        %v1400 = vsub.s32 0, %v1399
        %v1401 = vrot.slane %v1333, %v1400
        %v1402 = vmul.f32 %v1336, %v1401
        %v1403 = vmul.f32 %v1340, %v1401
        %v1404 = vmul.f32 %v1344, %v1401
        %v1405 = vmul.f32 %v1348, %v1401
        %v1406 = vmul.f32 %v1352, %v1401
        %v1407 = vmul.f32 %v1356, %v1401
        %v1408 = vmul.f32 %v1360, %v1401
        %v1409 = vmul.f32 %v1364, %v1401
        %v1410 = vmul.f32 %v1368, %v1401
        %v1411 = vmul.f32 %v1372, %v1401
        %v1412 = vmul.f32 %v1376, %v1401
        %v1413 = vmul.f32 %v1380, %v1401
        %v1414 = vmul.f32 %v1384, %v1401
        %v1415 = vmul.f32 %v1388, %v1401
        %v1416 = vmul.f32 %v1392, %v1401
        %v1417 = vmul.f32 %v1396, %v1401
        %v1418 = vadd.f32 %v1317, %v1402
        %v1419 = vadd.f32 %v1318, %v1403
        %v1420 = vadd.f32 %v1319, %v1404
        %v1421 = vadd.f32 %v1320, %v1405
        %v1422 = vadd.f32 %v1321, %v1406
        %v1423 = vadd.f32 %v1322, %v1407
        %v1424 = vadd.f32 %v1323, %v1408
        %v1425 = vadd.f32 %v1324, %v1409
        %v1426 = vadd.f32 %v1325, %v1410
        %v1427 = vadd.f32 %v1326, %v1411
        %v1428 = vadd.f32 %v1327, %v1412
        %v1429 = vadd.f32 %v1328, %v1413
        %v1430 = vadd.f32 %v1329, %v1414
        %v1431 = vadd.f32 %v1330, %v1415
        %v1432 = vadd.f32 %v1331, %v1416
        %v1433 = vadd.f32 %v1332, %v1417
        %v1434 = vld [vmem:[%s5] sm:$0xff]
        %v1435 = vld [vmem:[%s5 + $0x8] sm:$0xff]
        %v1436 = vld [vmem:[%s5 + $0x10] sm:$0xff]
        %v1437 = vld [vmem:[%s5 + $0x18] sm:$0xff]
        %v1438 = vld [vmem:[%s5 + $0x20] sm:$0xff]
        %v1439 = vld [vmem:[%s5 + $0x28] sm:$0xff]
        %v1440 = vld [vmem:[%s5 + $0x30] sm:$0xff]
        %v1441 = vld [vmem:[%s5 + $0x38] sm:$0xff]
        %v1442 = vld [vmem:[%s5 + $0x40] sm:$0xff]
        %v1443 = vld [vmem:[%s5 + $0x48] sm:$0xff]
        %v1444 = vld [vmem:[%s5 + $0x50] sm:$0xff]
        %v1445 = vld [vmem:[%s5 + $0x58] sm:$0xff]
        %v1446 = vld [vmem:[%s5 + $0x60] sm:$0xff]
        %v1447 = vld [vmem:[%s5 + $0x68] sm:$0xff]
        %v1448 = vld [vmem:[%s5 + $0x70] sm:$0xff]
        %v1449 = vld [vmem:[%s5 + $0x78] sm:$0xff]
        %1451 = vset.pattern.permute.xlu0 0
        %1452 = vperm.xlu0 %1451, %v1434
        %v1453 = vpop.permute.xlu0 %1452
        %1456 = vset.pattern.permute.xlu0 0
        %1457 = vperm.xlu0 %1456, %v1435
        %v1458 = vpop.permute.xlu0 %1457
        %1461 = vset.pattern.permute.xlu0 0
        %1462 = vperm.xlu0 %1461, %v1436
        %v1463 = vpop.permute.xlu0 %1462
        %1466 = vset.pattern.permute.xlu0 0
        %1467 = vperm.xlu0 %1466, %v1437
        %v1468 = vpop.permute.xlu0 %1467
        %1471 = vset.pattern.permute.xlu0 0
        %1472 = vperm.xlu0 %1471, %v1438
        %v1473 = vpop.permute.xlu0 %1472
        %1476 = vset.pattern.permute.xlu0 0
        %1477 = vperm.xlu0 %1476, %v1439
        %v1478 = vpop.permute.xlu0 %1477
        %1481 = vset.pattern.permute.xlu0 0
        %1482 = vperm.xlu0 %1481, %v1440
        %v1483 = vpop.permute.xlu0 %1482
        %1486 = vset.pattern.permute.xlu0 0
        %1487 = vperm.xlu0 %1486, %v1441
        %v1488 = vpop.permute.xlu0 %1487
        %1491 = vset.pattern.permute.xlu0 0
        %1492 = vperm.xlu0 %1491, %v1442
        %v1493 = vpop.permute.xlu0 %1492
        %1496 = vset.pattern.permute.xlu0 0
        %1497 = vperm.xlu0 %1496, %v1443
        %v1498 = vpop.permute.xlu0 %1497
        %1501 = vset.pattern.permute.xlu0 0
        %1502 = vperm.xlu0 %1501, %v1444
        %v1503 = vpop.permute.xlu0 %1502
        %1506 = vset.pattern.permute.xlu0 0
        %1507 = vperm.xlu0 %1506, %v1445
        %v1508 = vpop.permute.xlu0 %1507
        %1511 = vset.pattern.permute.xlu0 0
        %1512 = vperm.xlu0 %1511, %v1446
        %v1513 = vpop.permute.xlu0 %1512
        %1516 = vset.pattern.permute.xlu0 0
        %1517 = vperm.xlu0 %1516, %v1447
        %v1518 = vpop.permute.xlu0 %1517
        %1521 = vset.pattern.permute.xlu0 0
        %1522 = vperm.xlu0 %1521, %v1448
        %v1523 = vpop.permute.xlu0 %1522
        %1526 = vset.pattern.permute.xlu0 0
        %1527 = vperm.xlu0 %1526, %v1449
        %v1528 = vpop.permute.xlu0 %1527
        %v1530 = vadd.f32 %v1418, %v1453
        %v1531 = vadd.f32 %v1419, %v1458
        %v1532 = vadd.f32 %v1420, %v1463
        %v1533 = vadd.f32 %v1421, %v1468
        %v1534 = vadd.f32 %v1422, %v1473
        %v1535 = vadd.f32 %v1423, %v1478
        %v1536 = vadd.f32 %v1424, %v1483
        %v1537 = vadd.f32 %v1425, %v1488
        %v1538 = vadd.f32 %v1426, %v1493
        %v1539 = vadd.f32 %v1427, %v1498
        %v1540 = vadd.f32 %v1428, %v1503
        %v1541 = vadd.f32 %v1429, %v1508
        %v1542 = vadd.f32 %v1430, %v1513
        %v1543 = vadd.f32 %v1431, %v1518
        %v1544 = vadd.f32 %v1432, %v1523
        %v1545 = vadd.f32 %v1433, %v1528
        %v1546 = vadd.f32 %v897, %v1530
        %v1547 = vadd.f32 %v898, %v1531
        %v1548 = vadd.f32 %v899, %v1532
        %v1549 = vadd.f32 %v900, %v1533
        %v1550 = vadd.f32 %v901, %v1534
        %v1551 = vadd.f32 %v902, %v1535
        %v1552 = vadd.f32 %v903, %v1536
        %v1553 = vadd.f32 %v904, %v1537
        %v1554 = vadd.f32 %v905, %v1538
        %v1555 = vadd.f32 %v906, %v1539
        %v1556 = vadd.f32 %v907, %v1540
        %v1557 = vadd.f32 %v908, %v1541
        %v1558 = vadd.f32 %v909, %v1542
        %v1559 = vadd.f32 %v910, %v1543
        %v1560 = vadd.f32 %v911, %v1544
        %v1561 = vadd.f32 %v912, %v1545
        %v1562 = vmax.f32 %v1546, 0.0
        %v1563 = vmax.f32 %v1547, 0.0
        %v1564 = vmax.f32 %v1548, 0.0
        %v1565 = vmax.f32 %v1549, 0.0
        %v1566 = vmax.f32 %v1550, 0.0
        %v1567 = vmax.f32 %v1551, 0.0
        %v1568 = vmax.f32 %v1552, 0.0
        %v1569 = vmax.f32 %v1553, 0.0
        %v1570 = vmax.f32 %v1554, 0.0
        %v1571 = vmax.f32 %v1555, 0.0
        %v1572 = vmax.f32 %v1556, 0.0
        %v1573 = vmax.f32 %v1557, 0.0
        %v1574 = vmax.f32 %v1558, 0.0
        %v1575 = vmax.f32 %v1559, 0.0
        %v1576 = vmax.f32 %v1560, 0.0
        %v1577 = vmax.f32 %v1561, 0.0
        %1578 = vst [vmem:[#allocation4] sm:$0xff] %v1562
        %1579 = vst [vmem:[#allocation4 + $0x10] sm:$0xff] %v1563
        %1580 = vst [vmem:[#allocation4 + $0x20] sm:$0xff] %v1564
        %1581 = vst [vmem:[#allocation4 + $0x30] sm:$0xff] %v1565
        %1582 = vst [vmem:[#allocation4 + $0x40] sm:$0xff] %v1566
        %1583 = vst [vmem:[#allocation4 + $0x50] sm:$0xff] %v1567
        %1584 = vst [vmem:[#allocation4 + $0x60] sm:$0xff] %v1568
        %1585 = vst [vmem:[#allocation4 + $0x70] sm:$0xff] %v1569
        %1586 = vst [vmem:[#allocation4 + $0x80] sm:$0xff] %v1570
        %1587 = vst [vmem:[#allocation4 + $0x90] sm:$0xff] %v1571
        %1588 = vst [vmem:[#allocation4 + $0xa0] sm:$0xff] %v1572
        %1589 = vst [vmem:[#allocation4 + $0xb0] sm:$0xff] %v1573
        %1590 = vst [vmem:[#allocation4 + $0xc0] sm:$0xff] %v1574
        %1591 = vst [vmem:[#allocation4 + $0xd0] sm:$0xff] %v1575
        %1592 = vst [vmem:[#allocation4 + $0xe0] sm:$0xff] %v1576
        %1593 = vst [vmem:[#allocation4 + $0xf0] sm:$0xff] %v1577
        %1594 = vrot.lane.b32.xlu0 %v897, 1
        %v1595 = vpop.permute.xlu0 %1594
        %1596 = vrot.lane.b32.xlu0 %v898, 1
        %v1597 = vpop.permute.xlu0 %1596
        %1598 = vrot.lane.b32.xlu0 %v899, 1
        %v1599 = vpop.permute.xlu0 %1598
        %1600 = vrot.lane.b32.xlu0 %v900, 1
        %v1601 = vpop.permute.xlu0 %1600
        %1602 = vrot.lane.b32.xlu0 %v901, 1
        %v1603 = vpop.permute.xlu0 %1602
        %1604 = vrot.lane.b32.xlu0 %v902, 1
        %v1605 = vpop.permute.xlu0 %1604
        %1606 = vrot.lane.b32.xlu0 %v903, 1
        %v1607 = vpop.permute.xlu0 %1606
        %1608 = vrot.lane.b32.xlu0 %v904, 1
        %v1609 = vpop.permute.xlu0 %1608
        %1610 = vrot.lane.b32.xlu0 %v905, 1
        %v1611 = vpop.permute.xlu0 %1610
        %1612 = vrot.lane.b32.xlu0 %v906, 1
        %v1613 = vpop.permute.xlu0 %1612
        %1614 = vrot.lane.b32.xlu0 %v907, 1
        %v1615 = vpop.permute.xlu0 %1614
        %1616 = vrot.lane.b32.xlu0 %v908, 1
        %v1617 = vpop.permute.xlu0 %1616
        %1618 = vrot.lane.b32.xlu0 %v909, 1
        %v1619 = vpop.permute.xlu0 %1618
        %1620 = vrot.lane.b32.xlu0 %v910, 1
        %v1621 = vpop.permute.xlu0 %1620
        %1622 = vrot.lane.b32.xlu0 %v911, 1
        %v1623 = vpop.permute.xlu0 %1622
        %1624 = vrot.lane.b32.xlu0 %v912, 1
        %v1625 = vpop.permute.xlu0 %1624
        %v1626 = vadd.f32 %v1595, %v1530
        %v1627 = vadd.f32 %v1597, %v1531
        %v1628 = vadd.f32 %v1599, %v1532
        %v1629 = vadd.f32 %v1601, %v1533
        %v1630 = vadd.f32 %v1603, %v1534
        %v1631 = vadd.f32 %v1605, %v1535
        %v1632 = vadd.f32 %v1607, %v1536
        %v1633 = vadd.f32 %v1609, %v1537
        %v1634 = vadd.f32 %v1611, %v1538
        %v1635 = vadd.f32 %v1613, %v1539
        %v1636 = vadd.f32 %v1615, %v1540
        %v1637 = vadd.f32 %v1617, %v1541
        %v1638 = vadd.f32 %v1619, %v1542
        %v1639 = vadd.f32 %v1621, %v1543
        %v1640 = vadd.f32 %v1623, %v1544
        %v1641 = vadd.f32 %v1625, %v1545
        %v1642 = vmax.f32 %v1626, 0.0
        %v1643 = vmax.f32 %v1627, 0.0
        %v1644 = vmax.f32 %v1628, 0.0
        %v1645 = vmax.f32 %v1629, 0.0
        %v1646 = vmax.f32 %v1630, 0.0
        %v1647 = vmax.f32 %v1631, 0.0
        %v1648 = vmax.f32 %v1632, 0.0
        %v1649 = vmax.f32 %v1633, 0.0
        %v1650 = vmax.f32 %v1634, 0.0
        %v1651 = vmax.f32 %v1635, 0.0
        %v1652 = vmax.f32 %v1636, 0.0
        %v1653 = vmax.f32 %v1637, 0.0
        %v1654 = vmax.f32 %v1638, 0.0
        %v1655 = vmax.f32 %v1639, 0.0
        %v1656 = vmax.f32 %v1640, 0.0
        %v1657 = vmax.f32 %v1641, 0.0
        %1658 = vst [vmem:[#allocation4 + $0x8] sm:$0xff] %v1642
        %1659 = vst [vmem:[#allocation4 + $0x18] sm:$0xff] %v1643
        %1660 = vst [vmem:[#allocation4 + $0x28] sm:$0xff] %v1644
        %1661 = vst [vmem:[#allocation4 + $0x38] sm:$0xff] %v1645
        %1662 = vst [vmem:[#allocation4 + $0x48] sm:$0xff] %v1646
        %1663 = vst [vmem:[#allocation4 + $0x58] sm:$0xff] %v1647
        %1664 = vst [vmem:[#allocation4 + $0x68] sm:$0xff] %v1648
        %1665 = vst [vmem:[#allocation4 + $0x78] sm:$0xff] %v1649
        %1666 = vst [vmem:[#allocation4 + $0x88] sm:$0xff] %v1650
        %1667 = vst [vmem:[#allocation4 + $0x98] sm:$0xff] %v1651
        %1668 = vst [vmem:[#allocation4 + $0xa8] sm:$0xff] %v1652
        %1669 = vst [vmem:[#allocation4 + $0xb8] sm:$0xff] %v1653
        %1670 = vst [vmem:[#allocation4 + $0xc8] sm:$0xff] %v1654
        %1671 = vst [vmem:[#allocation4 + $0xd8] sm:$0xff] %v1655
        %1672 = vst [vmem:[#allocation4 + $0xe8] sm:$0xff] %v1656
        %1673 = vst [vmem:[#allocation4 + $0xf8] sm:$0xff] %v1657
        %v1674 = vld [vmem:[#allocation3] sm:$0xff]
        %v1675 = vld [vmem:[#allocation3 + $0x8] sm:$0xff]
        %v1676 = vld [vmem:[#allocation3 + $0x10] sm:$0xff]
        %v1677 = vld [vmem:[#allocation3 + $0x18] sm:$0xff]
        %v1678 = vld [vmem:[#allocation3 + $0x20] sm:$0xff]
        %v1679 = vld [vmem:[#allocation3 + $0x28] sm:$0xff]
        %v1680 = vld [vmem:[#allocation3 + $0x30] sm:$0xff]
        %v1681 = vld [vmem:[#allocation3 + $0x38] sm:$0xff]
        %v1682 = vld [vmem:[#allocation3 + $0x40] sm:$0xff]
        %v1683 = vld [vmem:[#allocation3 + $0x48] sm:$0xff]
        %v1684 = vld [vmem:[#allocation3 + $0x50] sm:$0xff]
        %v1685 = vld [vmem:[#allocation3 + $0x58] sm:$0xff]
        %v1686 = vld [vmem:[#allocation3 + $0x60] sm:$0xff]
        %v1687 = vld [vmem:[#allocation3 + $0x68] sm:$0xff]
        %v1688 = vld [vmem:[#allocation3 + $0x70] sm:$0xff]
        %v1689 = vld [vmem:[#allocation3 + $0x78] sm:$0xff]
        %v1690 = vadd.f32 %v1674, %v1530
        %v1691 = vadd.f32 %v1675, %v1531
        %v1692 = vadd.f32 %v1676, %v1532
        %v1693 = vadd.f32 %v1677, %v1533
        %v1694 = vadd.f32 %v1678, %v1534
        %v1695 = vadd.f32 %v1679, %v1535
        %v1696 = vadd.f32 %v1680, %v1536
        %v1697 = vadd.f32 %v1681, %v1537
        %v1698 = vadd.f32 %v1682, %v1538
        %v1699 = vadd.f32 %v1683, %v1539
        %v1700 = vadd.f32 %v1684, %v1540
        %v1701 = vadd.f32 %v1685, %v1541
        %v1702 = vadd.f32 %v1686, %v1542
        %v1703 = vadd.f32 %v1687, %v1543
        %v1704 = vadd.f32 %v1688, %v1544
        %v1705 = vadd.f32 %v1689, %v1545
        %v1706 = vmax.f32 %v1690, 0.0
        %v1707 = vmax.f32 %v1691, 0.0
        %v1708 = vmax.f32 %v1692, 0.0
        %v1709 = vmax.f32 %v1693, 0.0
        %v1710 = vmax.f32 %v1694, 0.0
        %v1711 = vmax.f32 %v1695, 0.0
        %v1712 = vmax.f32 %v1696, 0.0
        %v1713 = vmax.f32 %v1697, 0.0
        %v1714 = vmax.f32 %v1698, 0.0
        %v1715 = vmax.f32 %v1699, 0.0
        %v1716 = vmax.f32 %v1700, 0.0
        %v1717 = vmax.f32 %v1701, 0.0
        %v1718 = vmax.f32 %v1702, 0.0
        %v1719 = vmax.f32 %v1703, 0.0
        %v1720 = vmax.f32 %v1704, 0.0
        %v1721 = vmax.f32 %v1705, 0.0
        %vm1722 = vcmask 7168
        %1723 = vst.msk [vmem:[#allocation4 + $0x8] sm:$0xff] %vm1722, %v1706
        %1724 = vst.msk [vmem:[#allocation4 + $0x18] sm:$0xff] %vm1722, %v1707
        %1725 = vst.msk [vmem:[#allocation4 + $0x28] sm:$0xff] %vm1722, %v1708
        %1726 = vst.msk [vmem:[#allocation4 + $0x38] sm:$0xff] %vm1722, %v1709
        %1727 = vst.msk [vmem:[#allocation4 + $0x48] sm:$0xff] %vm1722, %v1710
        %1728 = vst.msk [vmem:[#allocation4 + $0x58] sm:$0xff] %vm1722, %v1711
        %1729 = vst.msk [vmem:[#allocation4 + $0x68] sm:$0xff] %vm1722, %v1712
        %1730 = vst.msk [vmem:[#allocation4 + $0x78] sm:$0xff] %vm1722, %v1713
        %1731 = vst.msk [vmem:[#allocation4 + $0x88] sm:$0xff] %vm1722, %v1714
        %1732 = vst.msk [vmem:[#allocation4 + $0x98] sm:$0xff] %vm1722, %v1715
        %1733 = vst.msk [vmem:[#allocation4 + $0xa8] sm:$0xff] %vm1722, %v1716
        %1734 = vst.msk [vmem:[#allocation4 + $0xb8] sm:$0xff] %vm1722, %v1717
        %1735 = vst.msk [vmem:[#allocation4 + $0xc8] sm:$0xff] %vm1722, %v1718
        %1736 = vst.msk [vmem:[#allocation4 + $0xd8] sm:$0xff] %vm1722, %v1719
        %1737 = vst.msk [vmem:[#allocation4 + $0xe8] sm:$0xff] %vm1722, %v1720
        %1738 = vst.msk [vmem:[#allocation4 + $0xf8] sm:$0xff] %vm1722, %v1721
        %1755 = vrot.lane.b32.xlu0 %v897, 1
        %v1756 = vpop.permute.xlu0 %1755
        %1757 = vrot.lane.b32.xlu0 %v898, 1
        %v1758 = vpop.permute.xlu0 %1757
        %1759 = vrot.lane.b32.xlu0 %v899, 1
        %v1760 = vpop.permute.xlu0 %1759
        %1761 = vrot.lane.b32.xlu0 %v900, 1
        %v1762 = vpop.permute.xlu0 %1761
        %1763 = vrot.lane.b32.xlu0 %v901, 1
        %v1764 = vpop.permute.xlu0 %1763
        %1765 = vrot.lane.b32.xlu0 %v902, 1
        %v1766 = vpop.permute.xlu0 %1765
        %1767 = vrot.lane.b32.xlu0 %v903, 1
        %v1768 = vpop.permute.xlu0 %1767
        %1769 = vrot.lane.b32.xlu0 %v904, 1
        %v1770 = vpop.permute.xlu0 %1769
        %1771 = vrot.lane.b32.xlu0 %v905, 1
        %v1772 = vpop.permute.xlu0 %1771
        %1773 = vrot.lane.b32.xlu0 %v906, 1
        %v1774 = vpop.permute.xlu0 %1773
        %1775 = vrot.lane.b32.xlu0 %v907, 1
        %v1776 = vpop.permute.xlu0 %1775
        %1777 = vrot.lane.b32.xlu0 %v908, 1
        %v1778 = vpop.permute.xlu0 %1777
        %1779 = vrot.lane.b32.xlu0 %v909, 1
        %v1780 = vpop.permute.xlu0 %1779
        %1781 = vrot.lane.b32.xlu0 %v910, 1
        %v1782 = vpop.permute.xlu0 %1781
        %1783 = vrot.lane.b32.xlu0 %v911, 1
        %v1784 = vpop.permute.xlu0 %1783
        %1785 = vrot.lane.b32.xlu0 %v912, 1
        %v1786 = vpop.permute.xlu0 %1785
        %1803 = vst.msk [vmem:[#allocation3] sm:$0xff] %vm1722, %v1756
        %1804 = vst.msk [vmem:[#allocation3 + $0x8] sm:$0xff] %vm1722, %v1758
        %1805 = vst.msk [vmem:[#allocation3 + $0x10] sm:$0xff] %vm1722, %v1760
        %1806 = vst.msk [vmem:[#allocation3 + $0x18] sm:$0xff] %vm1722, %v1762
        %1807 = vst.msk [vmem:[#allocation3 + $0x20] sm:$0xff] %vm1722, %v1764
        %1808 = vst.msk [vmem:[#allocation3 + $0x28] sm:$0xff] %vm1722, %v1766
        %1809 = vst.msk [vmem:[#allocation3 + $0x30] sm:$0xff] %vm1722, %v1768
        %1810 = vst.msk [vmem:[#allocation3 + $0x38] sm:$0xff] %vm1722, %v1770
        %1811 = vst.msk [vmem:[#allocation3 + $0x40] sm:$0xff] %vm1722, %v1772
        %1812 = vst.msk [vmem:[#allocation3 + $0x48] sm:$0xff] %vm1722, %v1774
        %1813 = vst.msk [vmem:[#allocation3 + $0x50] sm:$0xff] %vm1722, %v1776
        %1814 = vst.msk [vmem:[#allocation3 + $0x58] sm:$0xff] %vm1722, %v1778
        %1815 = vst.msk [vmem:[#allocation3 + $0x60] sm:$0xff] %vm1722, %v1780
        %1816 = vst.msk [vmem:[#allocation3 + $0x68] sm:$0xff] %vm1722, %v1782
        %1817 = vst.msk [vmem:[#allocation3 + $0x70] sm:$0xff] %vm1722, %v1784
        %1818 = vst.msk [vmem:[#allocation3 + $0x78] sm:$0xff] %vm1722, %v1786
        %v1819 = vld [vmem:[%s4] sm:$0xff]
        %v1820 = vld [vmem:[%s4 + $0x8] sm:$0xff]
        %v1821 = vld [vmem:[%s4 + $0x10] sm:$0xff]
        %v1822 = vld [vmem:[%s4 + $0x18] sm:$0xff]
        %v1823 = vld [vmem:[%s4 + $0x20] sm:$0xff]
        %v1824 = vld [vmem:[%s4 + $0x28] sm:$0xff]
        %v1825 = vld [vmem:[%s4 + $0x30] sm:$0xff]
        %v1826 = vld [vmem:[%s4 + $0x38] sm:$0xff]
        %v1827 = vld [vmem:[%s4 + $0x40] sm:$0xff]
        %v1828 = vld [vmem:[%s4 + $0x48] sm:$0xff]
        %v1829 = vld [vmem:[%s4 + $0x50] sm:$0xff]
        %v1830 = vld [vmem:[%s4 + $0x58] sm:$0xff]
        %v1831 = vld [vmem:[%s4 + $0x60] sm:$0xff]
        %v1832 = vld [vmem:[%s4 + $0x68] sm:$0xff]
        %v1833 = vld [vmem:[%s4 + $0x70] sm:$0xff]
        %v1834 = vld [vmem:[%s4 + $0x78] sm:$0xff]
        %v1835 = vld [vmem:[#allocation4] sm:$0xff]
        %v1836 = vld [vmem:[#allocation4 + $0x8] sm:$0xff]
        %v1837 = vld [vmem:[#allocation4 + $0x10] sm:$0xff]
        %v1838 = vld [vmem:[#allocation4 + $0x18] sm:$0xff]
        %v1839 = vld [vmem:[#allocation4 + $0x20] sm:$0xff]
        %v1840 = vld [vmem:[#allocation4 + $0x28] sm:$0xff]
        %v1841 = vld [vmem:[#allocation4 + $0x30] sm:$0xff]
        %v1842 = vld [vmem:[#allocation4 + $0x38] sm:$0xff]
        %v1843 = vld [vmem:[#allocation4 + $0x40] sm:$0xff]
        %v1844 = vld [vmem:[#allocation4 + $0x48] sm:$0xff]
        %v1845 = vld [vmem:[#allocation4 + $0x50] sm:$0xff]
        %v1846 = vld [vmem:[#allocation4 + $0x58] sm:$0xff]
        %v1847 = vld [vmem:[#allocation4 + $0x60] sm:$0xff]
        %v1848 = vld [vmem:[#allocation4 + $0x68] sm:$0xff]
        %v1849 = vld [vmem:[#allocation4 + $0x70] sm:$0xff]
        %v1850 = vld [vmem:[#allocation4 + $0x78] sm:$0xff]
        %v1851 = vld [vmem:[#allocation4 + $0x80] sm:$0xff]
        %v1852 = vld [vmem:[#allocation4 + $0x88] sm:$0xff]
        %v1853 = vld [vmem:[#allocation4 + $0x90] sm:$0xff]
        %v1854 = vld [vmem:[#allocation4 + $0x98] sm:$0xff]
        %v1855 = vld [vmem:[#allocation4 + $0xa0] sm:$0xff]
        %v1856 = vld [vmem:[#allocation4 + $0xa8] sm:$0xff]
        %v1857 = vld [vmem:[#allocation4 + $0xb0] sm:$0xff]
        %v1858 = vld [vmem:[#allocation4 + $0xb8] sm:$0xff]
        %v1859 = vld [vmem:[#allocation4 + $0xc0] sm:$0xff]
        %v1860 = vld [vmem:[#allocation4 + $0xc8] sm:$0xff]
        %v1861 = vld [vmem:[#allocation4 + $0xd0] sm:$0xff]
        %v1862 = vld [vmem:[#allocation4 + $0xd8] sm:$0xff]
        %v1863 = vld [vmem:[#allocation4 + $0xe0] sm:$0xff]
        %v1864 = vld [vmem:[#allocation4 + $0xe8] sm:$0xff]
        %v1865 = vld [vmem:[#allocation4 + $0xf0] sm:$0xff]
        %v1866 = vld [vmem:[#allocation4 + $0xf8] sm:$0xff]
        %v1867 = vld [vmem:[%s5] sm:$0xff]
        %v1868 = vld [vmem:[%s5 + $0x8] sm:$0xff]
        %v1869 = vld [vmem:[%s5 + $0x10] sm:$0xff]
        %v1870 = vld [vmem:[%s5 + $0x18] sm:$0xff]
        %v1871 = vld [vmem:[%s5 + $0x20] sm:$0xff]
        %v1872 = vld [vmem:[%s5 + $0x28] sm:$0xff]
        %v1873 = vld [vmem:[%s5 + $0x30] sm:$0xff]
        %v1874 = vld [vmem:[%s5 + $0x38] sm:$0xff]
        %v1875 = vld [vmem:[%s5 + $0x40] sm:$0xff]
        %v1876 = vld [vmem:[%s5 + $0x48] sm:$0xff]
        %v1877 = vld [vmem:[%s5 + $0x50] sm:$0xff]
        %v1878 = vld [vmem:[%s5 + $0x58] sm:$0xff]
        %v1879 = vld [vmem:[%s5 + $0x60] sm:$0xff]
        %v1880 = vld [vmem:[%s5 + $0x68] sm:$0xff]
        %v1881 = vld [vmem:[%s5 + $0x70] sm:$0xff]
        %v1882 = vld [vmem:[%s5 + $0x78] sm:$0xff]
        %1884 = vset.pattern.permute.xlu0 1
        %1885 = vperm.xlu0 %1884, %v1867
        %v1886 = vpop.permute.xlu0 %1885
        %1889 = vset.pattern.permute.xlu0 1
        %1890 = vperm.xlu0 %1889, %v1868
        %v1891 = vpop.permute.xlu0 %1890
        %1894 = vset.pattern.permute.xlu0 1
        %1895 = vperm.xlu0 %1894, %v1869
        %v1896 = vpop.permute.xlu0 %1895
        %1899 = vset.pattern.permute.xlu0 1
        %1900 = vperm.xlu0 %1899, %v1870
        %v1901 = vpop.permute.xlu0 %1900
        %1904 = vset.pattern.permute.xlu0 1
        %1905 = vperm.xlu0 %1904, %v1871
        %v1906 = vpop.permute.xlu0 %1905
        %1909 = vset.pattern.permute.xlu0 1
        %1910 = vperm.xlu0 %1909, %v1872
        %v1911 = vpop.permute.xlu0 %1910
        %1914 = vset.pattern.permute.xlu0 1
        %1915 = vperm.xlu0 %1914, %v1873
        %v1916 = vpop.permute.xlu0 %1915
        %1919 = vset.pattern.permute.xlu0 1
        %1920 = vperm.xlu0 %1919, %v1874
        %v1921 = vpop.permute.xlu0 %1920
        %1924 = vset.pattern.permute.xlu0 1
        %1925 = vperm.xlu0 %1924, %v1875
        %v1926 = vpop.permute.xlu0 %1925
        %1929 = vset.pattern.permute.xlu0 1
        %1930 = vperm.xlu0 %1929, %v1876
        %v1931 = vpop.permute.xlu0 %1930
        %1934 = vset.pattern.permute.xlu0 1
        %1935 = vperm.xlu0 %1934, %v1877
        %v1936 = vpop.permute.xlu0 %1935
        %1939 = vset.pattern.permute.xlu0 1
        %1940 = vperm.xlu0 %1939, %v1878
        %v1941 = vpop.permute.xlu0 %1940
        %1944 = vset.pattern.permute.xlu0 1
        %1945 = vperm.xlu0 %1944, %v1879
        %v1946 = vpop.permute.xlu0 %1945
        %1949 = vset.pattern.permute.xlu0 1
        %1950 = vperm.xlu0 %1949, %v1880
        %v1951 = vpop.permute.xlu0 %1950
        %1954 = vset.pattern.permute.xlu0 1
        %1955 = vperm.xlu0 %1954, %v1881
        %v1956 = vpop.permute.xlu0 %1955
        %1959 = vset.pattern.permute.xlu0 1
        %1960 = vperm.xlu0 %1959, %v1882
        %v1961 = vpop.permute.xlu0 %1960
        %1963 = vmatprep.subr.mxu0 %v1866
        %1964 = vmatpush1.msra.mxu0 %v1865
        %1965 = vmatprep.subr.mxu0 %v1864
        %1966 = vmatpush1.msra.mxu0 %v1863
        %1967 = vmatprep.subr.mxu0 %v1862
        %1968 = vmatpush1.msra.mxu0 %v1861
        %1969 = vmatprep.subr.mxu0 %v1860
        %1970 = vmatpush1.msra.mxu0 %v1859
        %1971 = vmatprep.subr.mxu0 %v1858
        %1972 = vmatpush1.msra.mxu0 %v1857
        %1973 = vmatprep.subr.mxu0 %v1856
        %1974 = vmatpush1.msra.mxu0 %v1855
        %1975 = vmatprep.subr.mxu0 %v1854
        %1976 = vmatpush1.msra.mxu0 %v1853
        %1977 = vmatprep.subr.mxu0 %v1852
        %1978 = vmatpush1.msra.mxu0 %v1851
        %1979 = vmatprep.subr.mxu0 %v1850
        %1980 = vmatpush1.msra.mxu0 %v1849
        %1981 = vmatprep.subr.mxu0 %v1848
        %1982 = vmatpush1.msra.mxu0 %v1847
        %1983 = vmatprep.subr.mxu0 %v1846
        %1984 = vmatpush1.msra.mxu0 %v1845
        %1985 = vmatprep.subr.mxu0 %v1844
        %1986 = vmatpush1.msra.mxu0 %v1843
        %1987 = vmatprep.subr.mxu0 %v1842
        %1988 = vmatpush1.msra.mxu0 %v1841
        %1989 = vmatprep.subr.mxu0 %v1840
        %1990 = vmatpush1.msra.mxu0 %v1839
        %1991 = vmatprep.subr.mxu0 %v1838
        %1992 = vmatpush1.msra.mxu0 %v1837
        %1993 = vmatprep.subr.mxu0 %v1836
        %1994 = vmatpush1.msra.mxu0 %v1835
        %1995 = vmatprep.subr.mxu0 0.0
        %1996 = vmatpush2.msra.mxu0 0.0
        %1997 = vmatprep.subr.mxu0 0.0
        %1998 = vmatpush2.msra.mxu0 0.0
        %1999 = vmatprep.subr.mxu0 0.0
        %2000 = vmatpush2.msra.mxu0 0.0
        %2001 = vmatprep.subr.mxu0 0.0
        %2002 = vmatpush2.msra.mxu0 0.0
        %2003 = vmatprep.subr.mxu0 0.0
        %2004 = vmatpush2.msra.mxu0 0.0
        %2005 = vmatprep.subr.mxu0 0.0
        %2006 = vmatpush2.msra.mxu0 0.0
        %2007 = vmatprep.subr.mxu0 0.0
        %2008 = vmatpush2.msra.mxu0 0.0
        %2009 = vmatprep.subr.mxu0 0.0
        %2010 = vmatpush2.msra.mxu0 0.0
        %2011 = vmatprep.subr.mxu0 0.0
        %2012 = vmatpush2.msra.mxu0 0.0
        %2013 = vmatprep.subr.mxu0 0.0
        %2014 = vmatpush2.msra.mxu0 0.0
        %2015 = vmatprep.subr.mxu0 0.0
        %2016 = vmatpush2.msra.mxu0 0.0
        %2017 = vmatprep.subr.mxu0 0.0
        %2018 = vmatpush2.msra.mxu0 0.0
        %2019 = vmatprep.subr.mxu0 0.0
        %2020 = vmatpush2.msra.mxu0 0.0
        %2021 = vmatprep.subr.mxu0 0.0
        %2022 = vmatpush2.msra.mxu0 0.0
        %2023 = vmatprep.subr.mxu0 0.0
        %2024 = vmatpush2.msra.mxu0 0.0
        %2025 = vmatprep.subr.mxu0 0.0
        %2026 = vmatpush2.msra.mxu0 0.0
        %2027 = vmatprep.mubr.f32.mxu0 0.0
        %2028 = vmatmul.mubr.f32.gmra.mxu0 %v1819
        %v2029 = vpop.f32.mrf.mxu0
        %v2030 = vadd.f32 %v1886, %v2029
        %v2031 = vpop.f32.mrf.mxu0
        %v2032 = vadd.f32 %v1886, %v2031
        %2033 = vmatprep.mubr.f32.mxu0 0.0
        %2034 = vmatmul.mubr.f32.gmra.mxu0 %v1820
        %v2035 = vpop.f32.mrf.mxu0
        %v2036 = vadd.f32 %v1891, %v2035
        %v2037 = vpop.f32.mrf.mxu0
        %v2038 = vadd.f32 %v1891, %v2037
        %2039 = vmatprep.mubr.f32.mxu0 0.0
        %2040 = vmatmul.mubr.f32.gmra.mxu0 %v1821
        %v2041 = vpop.f32.mrf.mxu0
        %v2042 = vadd.f32 %v1896, %v2041
        %v2043 = vpop.f32.mrf.mxu0
        %v2044 = vadd.f32 %v1896, %v2043
        %2045 = vmatprep.mubr.f32.mxu0 0.0
        %2046 = vmatmul.mubr.f32.gmra.mxu0 %v1822
        %v2047 = vpop.f32.mrf.mxu0
        %v2048 = vadd.f32 %v1901, %v2047
        %v2049 = vpop.f32.mrf.mxu0
        %v2050 = vadd.f32 %v1901, %v2049
        %2051 = vmatprep.mubr.f32.mxu0 0.0
        %2052 = vmatmul.mubr.f32.gmra.mxu0 %v1823
        %v2053 = vpop.f32.mrf.mxu0
        %v2054 = vadd.f32 %v1906, %v2053
        %v2055 = vpop.f32.mrf.mxu0
        %v2056 = vadd.f32 %v1906, %v2055
        %2057 = vmatprep.mubr.f32.mxu0 0.0
        %2058 = vmatmul.mubr.f32.gmra.mxu0 %v1824
        %v2059 = vpop.f32.mrf.mxu0
        %v2060 = vadd.f32 %v1911, %v2059
        %v2061 = vpop.f32.mrf.mxu0
        %v2062 = vadd.f32 %v1911, %v2061
        %2063 = vmatprep.mubr.f32.mxu0 0.0
        %2064 = vmatmul.mubr.f32.gmra.mxu0 %v1825
        %v2065 = vpop.f32.mrf.mxu0
        %v2066 = vadd.f32 %v1916, %v2065
        %v2067 = vpop.f32.mrf.mxu0
        %v2068 = vadd.f32 %v1916, %v2067
        %2069 = vmatprep.mubr.f32.mxu0 0.0
        %2070 = vmatmul.mubr.f32.gmra.mxu0 %v1826
        %v2071 = vpop.f32.mrf.mxu0
        %v2072 = vadd.f32 %v1921, %v2071
        %v2073 = vpop.f32.mrf.mxu0
        %v2074 = vadd.f32 %v1921, %v2073
        %2075 = vmatprep.mubr.f32.mxu0 0.0
        %2076 = vmatmul.mubr.f32.gmra.mxu0 %v1827
        %v2077 = vpop.f32.mrf.mxu0
        %v2078 = vadd.f32 %v1926, %v2077
        %v2079 = vpop.f32.mrf.mxu0
        %v2080 = vadd.f32 %v1926, %v2079
        %2081 = vmatprep.mubr.f32.mxu0 0.0
        %2082 = vmatmul.mubr.f32.gmra.mxu0 %v1828
        %v2083 = vpop.f32.mrf.mxu0
        %v2084 = vadd.f32 %v1931, %v2083
        %v2085 = vpop.f32.mrf.mxu0
        %v2086 = vadd.f32 %v1931, %v2085
        %2087 = vmatprep.mubr.f32.mxu0 0.0
        %2088 = vmatmul.mubr.f32.gmra.mxu0 %v1829
        %v2089 = vpop.f32.mrf.mxu0
        %v2090 = vadd.f32 %v1936, %v2089
        %v2091 = vpop.f32.mrf.mxu0
        %v2092 = vadd.f32 %v1936, %v2091
        %2093 = vmatprep.mubr.f32.mxu0 0.0
        %2094 = vmatmul.mubr.f32.gmra.mxu0 %v1830
        %v2095 = vpop.f32.mrf.mxu0
        %v2096 = vadd.f32 %v1941, %v2095
        %v2097 = vpop.f32.mrf.mxu0
        %v2098 = vadd.f32 %v1941, %v2097
        %2099 = vmatprep.mubr.f32.mxu0 0.0
        %2100 = vmatmul.mubr.f32.gmra.mxu0 %v1831
        %v2101 = vpop.f32.mrf.mxu0
        %v2102 = vadd.f32 %v1946, %v2101
        %v2103 = vpop.f32.mrf.mxu0
        %v2104 = vadd.f32 %v1946, %v2103
        %2105 = vmatprep.mubr.f32.mxu0 0.0
        %2106 = vmatmul.mubr.f32.gmra.mxu0 %v1832
        %v2107 = vpop.f32.mrf.mxu0
        %v2108 = vadd.f32 %v1951, %v2107
        %v2109 = vpop.f32.mrf.mxu0
        %v2110 = vadd.f32 %v1951, %v2109
        %2111 = vmatprep.mubr.f32.mxu0 0.0
        %2112 = vmatmul.mubr.f32.gmra.mxu0 %v1833
        %v2113 = vpop.f32.mrf.mxu0
        %v2114 = vadd.f32 %v1956, %v2113
        %v2115 = vpop.f32.mrf.mxu0
        %v2116 = vadd.f32 %v1956, %v2115
        %2117 = vmatprep.mubr.f32.mxu0 0.0
        %2118 = vmatmul.mubr.f32.gmra.mxu0 %v1834
        %v2119 = vpop.f32.mrf.mxu0
        %v2120 = vadd.f32 %v1961, %v2119
        %v2121 = vpop.f32.mrf.mxu0
        %v2122 = vadd.f32 %v1961, %v2121
        %2123 = vdwg.mxu0
        %v2124 = vmax.f32 %v2030, 0.0
        %v2125 = vmax.f32 %v2032, 0.0
        %v2126 = vmax.f32 %v2036, 0.0
        %v2127 = vmax.f32 %v2038, 0.0
        %v2128 = vmax.f32 %v2042, 0.0
        %v2129 = vmax.f32 %v2044, 0.0
        %v2130 = vmax.f32 %v2048, 0.0
        %v2131 = vmax.f32 %v2050, 0.0
        %v2132 = vmax.f32 %v2054, 0.0
        %v2133 = vmax.f32 %v2056, 0.0
        %v2134 = vmax.f32 %v2060, 0.0
        %v2135 = vmax.f32 %v2062, 0.0
        %v2136 = vmax.f32 %v2066, 0.0
        %v2137 = vmax.f32 %v2068, 0.0
        %v2138 = vmax.f32 %v2072, 0.0
        %v2139 = vmax.f32 %v2074, 0.0
        %v2140 = vmax.f32 %v2078, 0.0
        %v2141 = vmax.f32 %v2080, 0.0
        %v2142 = vmax.f32 %v2084, 0.0
        %v2143 = vmax.f32 %v2086, 0.0
        %v2144 = vmax.f32 %v2090, 0.0
        %v2145 = vmax.f32 %v2092, 0.0
        %v2146 = vmax.f32 %v2096, 0.0
        %v2147 = vmax.f32 %v2098, 0.0
        %v2148 = vmax.f32 %v2102, 0.0
        %v2149 = vmax.f32 %v2104, 0.0
        %v2150 = vmax.f32 %v2108, 0.0
        %v2151 = vmax.f32 %v2110, 0.0
        %v2152 = vmax.f32 %v2114, 0.0
        %v2153 = vmax.f32 %v2116, 0.0
        %v2154 = vmax.f32 %v2120, 0.0
        %v2155 = vmax.f32 %v2122, 0.0
        %2156 = vset.pattern.permute.xlu0 2
        %2157 = vperm.xlu0 %2156, %v1867
        %v2158 = vpop.permute.xlu0 %2157
        %2160 = vset.pattern.permute.xlu0 2
        %2161 = vperm.xlu0 %2160, %v1868
        %v2162 = vpop.permute.xlu0 %2161
        %2164 = vset.pattern.permute.xlu0 2
        %2165 = vperm.xlu0 %2164, %v1869
        %v2166 = vpop.permute.xlu0 %2165
        %2168 = vset.pattern.permute.xlu0 2
        %2169 = vperm.xlu0 %2168, %v1870
        %v2170 = vpop.permute.xlu0 %2169
        %2172 = vset.pattern.permute.xlu0 2
        %2173 = vperm.xlu0 %2172, %v1871
        %v2174 = vpop.permute.xlu0 %2173
        %2176 = vset.pattern.permute.xlu0 2
        %2177 = vperm.xlu0 %2176, %v1872
        %v2178 = vpop.permute.xlu0 %2177
        %2180 = vset.pattern.permute.xlu0 2
        %2181 = vperm.xlu0 %2180, %v1873
        %v2182 = vpop.permute.xlu0 %2181
        %2184 = vset.pattern.permute.xlu0 2
        %2185 = vperm.xlu0 %2184, %v1874
        %v2186 = vpop.permute.xlu0 %2185
        %2188 = vset.pattern.permute.xlu0 2
        %2189 = vperm.xlu0 %2188, %v1875
        %v2190 = vpop.permute.xlu0 %2189
        %2192 = vset.pattern.permute.xlu0 2
        %2193 = vperm.xlu0 %2192, %v1876
        %v2194 = vpop.permute.xlu0 %2193
        %2196 = vset.pattern.permute.xlu0 2
        %2197 = vperm.xlu0 %2196, %v1877
        %v2198 = vpop.permute.xlu0 %2197
        %2200 = vset.pattern.permute.xlu0 2
        %2201 = vperm.xlu0 %2200, %v1878
        %v2202 = vpop.permute.xlu0 %2201
        %2204 = vset.pattern.permute.xlu0 2
        %2205 = vperm.xlu0 %2204, %v1879
        %v2206 = vpop.permute.xlu0 %2205
        %2208 = vset.pattern.permute.xlu0 2
        %2209 = vperm.xlu0 %2208, %v1880
        %v2210 = vpop.permute.xlu0 %2209
        %2212 = vset.pattern.permute.xlu0 2
        %2213 = vperm.xlu0 %2212, %v1881
        %v2214 = vpop.permute.xlu0 %2213
        %2216 = vset.pattern.permute.xlu0 2
        %2217 = vperm.xlu0 %2216, %v1882
        %v2218 = vpop.permute.xlu0 %2217
        %v2220 = vmul.f32 %v2124, %v2158
        %v2221 = vmul.f32 %v2125, %v2158
        %v2222 = vmul.f32 %v2126, %v2162
        %v2223 = vmul.f32 %v2127, %v2162
        %v2224 = vmul.f32 %v2128, %v2166
        %v2225 = vmul.f32 %v2129, %v2166
        %v2226 = vmul.f32 %v2130, %v2170
        %v2227 = vmul.f32 %v2131, %v2170
        %v2228 = vmul.f32 %v2132, %v2174
        %v2229 = vmul.f32 %v2133, %v2174
        %v2230 = vmul.f32 %v2134, %v2178
        %v2231 = vmul.f32 %v2135, %v2178
        %v2232 = vmul.f32 %v2136, %v2182
        %v2233 = vmul.f32 %v2137, %v2182
        %v2234 = vmul.f32 %v2138, %v2186
        %v2235 = vmul.f32 %v2139, %v2186
        %v2236 = vmul.f32 %v2140, %v2190
        %v2237 = vmul.f32 %v2141, %v2190
        %v2238 = vmul.f32 %v2142, %v2194
        %v2239 = vmul.f32 %v2143, %v2194
        %v2240 = vmul.f32 %v2144, %v2198
        %v2241 = vmul.f32 %v2145, %v2198
        %v2242 = vmul.f32 %v2146, %v2202
        %v2243 = vmul.f32 %v2147, %v2202
        %v2244 = vmul.f32 %v2148, %v2206
        %v2245 = vmul.f32 %v2149, %v2206
        %v2246 = vmul.f32 %v2150, %v2210
        %v2247 = vmul.f32 %v2151, %v2210
        %v2248 = vmul.f32 %v2152, %v2214
        %v2249 = vmul.f32 %v2153, %v2214
        %v2250 = vmul.f32 %v2154, %v2218
        %v2251 = vmul.f32 %v2155, %v2218
        %v2252 = vadd.f32 %v2220, %v2222
        %v2253 = vadd.f32 %v2252, %v2224
        %v2254 = vadd.f32 %v2253, %v2226
        %v2255 = vadd.f32 %v2254, %v2228
        %v2256 = vadd.f32 %v2255, %v2230
        %v2257 = vadd.f32 %v2256, %v2232
        %v2258 = vadd.f32 %v2257, %v2234
        %v2259 = vadd.f32 %v2258, %v2236
        %v2260 = vadd.f32 %v2259, %v2238
        %v2261 = vadd.f32 %v2260, %v2240
        %v2262 = vadd.f32 %v2261, %v2242
        %v2263 = vadd.f32 %v2262, %v2244
        %v2264 = vadd.f32 %v2263, %v2246
        %v2265 = vadd.f32 %v2264, %v2248
        %v2266 = vadd.f32 %v2265, %v2250
        %v2267 = vrot.slane %v2266, 4
        %v2268 = vadd.f32 %v2266, %v2267
        %v2269 = vrot.slane %v2268, 2
        %v2270 = vadd.f32 %v2268, %v2269
        %v2271 = vrot.slane %v2270, 1
        %v2272 = vadd.f32 %v2270, %v2271
        %v2273 = vadd.f32 %v2221, %v2223
        %v2274 = vadd.f32 %v2273, %v2225
        %v2275 = vadd.f32 %v2274, %v2227
        %v2276 = vadd.f32 %v2275, %v2229
        %v2277 = vadd.f32 %v2276, %v2231
        %v2278 = vadd.f32 %v2277, %v2233
        %v2279 = vadd.f32 %v2278, %v2235
        %v2280 = vadd.f32 %v2279, %v2237
        %v2281 = vadd.f32 %v2280, %v2239
        %v2282 = vadd.f32 %v2281, %v2241
        %v2283 = vadd.f32 %v2282, %v2243
        %v2284 = vadd.f32 %v2283, %v2245
        %v2285 = vadd.f32 %v2284, %v2247
        %v2286 = vadd.f32 %v2285, %v2249
        %v2287 = vadd.f32 %v2286, %v2251
        %v2288 = vrot.slane %v2287, 4
        %v2289 = vadd.f32 %v2287, %v2288
        %v2290 = vrot.slane %v2289, 2
        %v2291 = vadd.f32 %v2289, %v2290
        %v2292 = vrot.slane %v2291, 1
        %v2293 = vadd.f32 %v2291, %v2292
        %v2294 = vld [vmem:[%s5] sm:$0x1]
        %2296 = vset.pattern.permute.xlu0 3
        %2297 = vperm.xlu0 %2296, %v2294
        %v2298 = vpop.permute.xlu0 %2297
        %v2300 = vadd.f32 %v2272, %v2298
        %v2301 = vadd.f32 %v2293, %v2298
        %v2302 = vsub.f32 0.0, %v2300
        %v2303 = vmax.f32 %v2302, 0.0
        %v2304 = vand.u32 2147483647, %v2302
        %v2305 = vsub.f32 0.0, %v2304
        %v2306 = vmul.f32 %v2305, 1.442695
        %v2307 = vpow.pop %v2306
        %v2308 = vadd.f32 %v2307, 1.0
        %v2309 = vlog2.pop %v2308
        %v2310 = vmul.f32 %v2309, 0.6931472
        %v2311 = vmul.f32 -0.5, %v2307
        %v2312 = vadd.f32 %v2311, 1.0
        %v2313 = vmul.f32 %v2312, %v2307
        %v2314 = vand.u32 2147483647, %v2307
        %vm2315 = vcmp.lt.f32.partialorder %v2314, 0.0004427343
        %v2316 = vsel %vm2315, %v2313, %v2310
        %v2317 = vadd.f32 %v2303, %v2316
        %v2318 = vmax.f32 %v2301, 0.0
        %v2319 = vand.u32 2147483647, %v2301
        %v2320 = vsub.f32 0.0, %v2319
        %v2321 = vmul.f32 %v2320, 1.442695
        %v2322 = vpow.pop %v2321
        %v2323 = vadd.f32 %v2322, 1.0
        %v2324 = vlog2.pop %v2323
        %v2325 = vmul.f32 %v2324, 0.6931472
        %v2326 = vmul.f32 -0.5, %v2322
        %v2327 = vadd.f32 %v2326, 1.0
        %v2328 = vmul.f32 %v2327, %v2322
        %v2329 = vand.u32 2147483647, %v2322
        %vm2330 = vcmp.lt.f32.partialorder %v2329, 0.0004427343
        %v2331 = vsel %vm2330, %v2328, %v2325
        %v2332 = vadd.f32 %v2318, %v2331
        %v2333 = vadd.f32 %v2317, %v2332
        %v2334 = vld [vmem:[#allocation2] sm:$0x1]
        %vm2335 = vcmask 1040384
        %v2336 = vsel %vm2335, %v2333, 0.0
        %2337 = vadd.xlane.f32.xlu0 %v2336
        %v2338 = vpop.xlane.xlu0 %2337
        %v2339 = vadd.f32 %v2334, %v2338
        %vm2340 = vcmask 0
        %2341 = vst.msk [vmem:[#allocation2] sm:$0x1] %vm2340, %v2339
        %p2342 = scmp.eq.s32.totalorder %s25, 1
        // Predicated region
        $region57: #{tpu_custom_call.1} parent=47 // pred_check
          %p2343 = pneg %p2342
        $region58: #{tpu_custom_call.1} parent=47 // pred_check_branch
          %2345 = sbr.rel (%p2343) target = $region60
        $region59: #{tpu_custom_call.1} parent=47 // pred_region
          %v2346 = vld [vmem:[#allocation2] sm:$0x1]
          %v2347 = vmul.f32 %v2346, 0.001953125
          %v2349 = vlaneseq
          %v2350 = vshrl.u32 %v2349, 7
          %v2351 = vsub.s32 0, %v2350
          %v2352 = vrot.slane %v2347, %v2351
          %2353 = vset.pattern.permute.xlu0 0
          %2354 = vperm.xlu0 %2353, %v2352
          %v2355 = vpop.permute.xlu0 %2354
          %2357 = vst [vmem:[#allocation8] sm:$0xff] %v2355
        $region60: #{tpu_custom_call.1} parent=47 // pred_fallthru
          _
        // Predicated region
        $region61: #{tpu_custom_call.1} parent=47 // pred_check
          %p2358 = pneg %p215
        $region62: #{tpu_custom_call.1} parent=47 // pred_check_branch
          %2360 = sbr.rel (%p2358) target = $region64
        $region63: #{tpu_custom_call.1} parent=47 // pred_region
          %s2362 = ssub.s32 128, 128
          %2363 = vsyncadd [#allocation6], %s2362
          %s2364 = smul.addr %s24, 128
          %s2365 = scalar_lea.hbm %s7, %s2364
          %s2367 = sshll.u32 [#allocation8], 4
          %s2368 = int_to_ptr.vmem [resolvable:$true] %s2367
          %2370 = dma.vmem_to_hbm [thread:$0]  %s2368, 128, %s2365, [#allocation6]
        $region64: #{tpu_custom_call.1} parent=47 // pred_fallthru
          _
        // Predicated region
        $region65: #{tpu_custom_call.1} parent=47 // pred_check
          %p2371 = pneg %p215
        $region66: #{tpu_custom_call.1} parent=47 // pred_check_branch
          %2373 = sbr.rel (%p2371) target = $region68
        $region67: #{tpu_custom_call.1} parent=47 // pred_region
          %2374 = dma.done [#allocation6], 128
        $region68: #{tpu_custom_call.1} parent=47 // pred_fallthru
          _
      $region48: #{tpu_custom_call.1} parent=5 // pred_fallthru
        _
      %p2375 = scmp.le.s32.totalorder 2, %s15
      // Predicated region
      $region69: #{tpu_custom_call.1} parent=5 // pred_check
        %p2376 = pneg %p2375
      $region70: #{tpu_custom_call.1} parent=5 // pred_check_branch
        %2378 = sbr.rel (%p2376) target = $region72
      $region71: #{tpu_custom_call.1} parent=5 // pred_region
        %s2379 = ssub.s32 %s15, 2
      $region72: #{tpu_custom_call.1} parent=5 // pred_fallthru
        _
    $region6: #{tpu_custom_call.1} parent=1 // loop_footer
      %s19 = sadd.s32 1, %s15
    $region7: #{tpu_custom_call.1} parent=1 // loop_footer_branch
      %14 = sbr.rel target = $region3
    $region8: #{tpu_custom_call.1} parent=1 // loop_exit
      _
    %2380 = vsyncpa [#allocation6], 1
    %s2381 = scalar_lea.sflag [#allocation6], 1
    %2382 = vsyncpa %s2381, 1
    %2383 = vsyncpa [#allocation7], 1
    %s2384 = scalar_lea.sflag [#allocation7], 1
    %2385 = vsyncpa %s2384, 1

</llo_original>
